<compile_context>
chip_gen: v7x
topology: tpu7x:2x2x1
jax: 0.10.0
libtpu: 0.0.40
codegen_flags: <defaults>
</compile_context>

<pallas_src>
import functools

import jax
import jax.numpy as jnp
from jax.experimental import pallas as pl
from jax.experimental.pallas import tpu as pltpu


def mlp_block_kernel(x_ref, g_ref, b_ref, w1_ref, b1_ref, w2_ref, b2_ref,
                     o_ref, xn_ref, acc_ref, *, eps: float):
    """Grid = (row tiles, H tiles); the H axis (axis 1) is the reduction axis."""
    k = pl.program_id(1)

    # First H step for this row tile: LayerNorm once (f32 stats), stash the
    # normalized rows in the MXU dtype, and seed the accumulator with the
    # broadcast output bias (saves a separate bias add in the epilogue).
    @pl.when(k == 0)
    def _():
        x = x_ref[...].astype(jnp.float32)                      # (tm, D)
        mean = jnp.mean(x, axis=-1, keepdims=True)
        var = jnp.mean(jnp.square(x - mean), axis=-1, keepdims=True)
        xn = (x - mean) * jax.lax.rsqrt(var + eps)
        xn = xn * g_ref[...].astype(jnp.float32) + b_ref[...].astype(jnp.float32)
        xn_ref[...] = xn.astype(xn_ref.dtype)                   # bf16 for the MXU
        acc_ref[...] = jnp.zeros_like(acc_ref) + b2_ref[...].astype(jnp.float32)

    # Linear 1 slice (D -> th): bf16 x bf16 operands, f32 accumulation.
    h = jnp.dot(xn_ref[...], w1_ref[...], preferred_element_type=jnp.float32)
    h = h + b1_ref[...].astype(jnp.float32)

    # Exact (erf) GELU in f32 — matches nn.GELU() default.
    h = 0.5 * h * (1.0 + jax.lax.erf(h * 0.7071067811865476))

    # Dropout (p=0.1) is identity in eval-mode forward.

    # Linear 2 partial product (th -> D), accumulated over the H grid axis.
    acc_ref[...] += jnp.dot(h.astype(w2_ref.dtype), w2_ref[...],
                            preferred_element_type=jnp.float32)

    # Last H step: lane-dense full-tile store.
    @pl.when(k == pl.num_programs(1) - 1)
    def _():
        o_ref[...] = acc_ref[...].astype(o_ref.dtype)


def _round_down(value: int, align: int) -> int:
    return max(align, (value // align) * align)


def _round_up(value: int, align: int) -> int:
    return align * pl.cdiv(value, align)


def mlp_block(x, gamma, beta, w1, b1, w2, b2, *, eps=1e-5, tm=None, th=None,
              compute_dtype=jnp.bfloat16):
    """x: (batch, seq, D). Weights stored as (in, out) — i.e. PyTorch weight.T."""
    batch, seq, d = x.shape
    hdim = w1.shape[1]
    m = batch * seq

    x_it = jnp.dtype(x.dtype).itemsize
    c_it = jnp.dtype(compute_dtype).itemsize
    w_it = c_it                                   # weights cast to compute_dtype

    # --- generation-aware VMEM budget (v7x: 64 MiB, v5e/v6e: 128 MiB) --------
    try:
        vmem_cap = int(pltpu.get_tpu_info().vmem_capacity_bytes)
    except Exception:                             # conservative default (v7x)
        vmem_cap = 64 << 20
    vmem_budget = int(vmem_cap * 0.85)            # headroom for compiler temps

    # --- tile selection -------------------------------------------------------
    row_align = 16                                # safe for f32 and bf16 tiles
    h_align = 256                                 # v6e/v7x MXU is 2x256x256

    # Row tile: large enough to hide weight streaming behind the two matmuls
    # (arithmetic intensity ~ 2*tm/itemsize -> ~256 rows on v5e, ~640 on
    # v6e/v7x with bf16 weights).  Clamped by m and the VMEM budget below.
    if tm is None:
        tm = 640
    if th is None:
        th = 1024

    tm = _round_down(min(tm, max(m, row_align)), row_align)
    # v7x has 2 TensorCores: make sure the "parallel" row axis has >= 2 steps.
    if pl.cdiv(m, tm) < 2 and m > row_align:
        tm = _round_up(pl.cdiv(m, 2), row_align)

    hdim_full = _round_up(hdim, h_align)

    def vmem_need(tm_, th_):
        return (2 * tm_ * d * x_it                # x row tile (double buffered)
                + 2 * tm_ * d * x_it              # out row tile (double buffered)
                + tm_ * d * c_it                  # LayerNorm scratch (bf16)
                + tm_ * d * 4                     # f32 accumulator
                + tm_ * th_ * 4                   # live (tm, th) GELU block
                + 2 * (2 * d * th_ + th_) * w_it  # w1 + w2 + b1 (double buffered)
                + 2 * 3 * d * 4)                  # gamma, beta, b2

    # Weights-resident fast path: if the full H fits, th == H so the weight
    # block indices are constant over the whole grid -> DMA'd exactly once.
    if vmem_need(tm, hdim_full) <= vmem_budget:
        th = hdim_full
    else:
        th = _round_down(min(th, hdim_full), h_align)

    # Fit the VMEM budget: shrink the row tile first, then the H tile.
    while vmem_need(tm, th) > vmem_budget and tm > row_align:
        tm = _round_down(tm // 2, row_align)
    while vmem_need(tm, th) > vmem_budget and th > h_align:
        th = _round_down(th // 2, h_align)

    # Rebalance tiles to minimize padded rows / hidden columns.
    n_rows = pl.cdiv(m, tm)
    tm = _round_up(pl.cdiv(m, n_rows), row_align)
    n_th = pl.cdiv(hdim, th)
    th = _round_up(pl.cdiv(hdim, n_th), h_align)
    m_pad = n_rows * tm
    hdim_pad = n_th * th

    # --- pad + lay out operands ----------------------------------------------
    x2 = x.reshape(m, d)
    if m_pad != m:
        x2 = jnp.pad(x2, ((0, m_pad - m), (0, 0)))
    if hdim_pad != hdim:
        w1 = jnp.pad(w1, ((0, 0), (0, hdim_pad - hdim)))
        b1 = jnp.pad(b1, ((0, hdim_pad - hdim),))
        w2 = jnp.pad(w2, ((0, hdim_pad - hdim), (0, 0)))

    # bf16 MXU operands; w1 pre-laid-out as (H//th, D, th) so each H slice is a
    # contiguous HBM slab (w2's row slice is already contiguous).
    w1c = w1.astype(compute_dtype).reshape(d, n_th, th).transpose(1, 0, 2)
    w2c = w2.astype(compute_dtype)

    gamma2 = gamma.reshape(1, d)
    beta2 = beta.reshape(1, d)
    b1_2 = b1.reshape(1, hdim_pad)
    b2_2 = b2.reshape(1, d)

    grid = (m_pad // tm, n_th)

    weight_bytes = (2 * d * hdim_pad + hdim_pad) * w_it
    weight_reads = weight_bytes if n_th == 1 else weight_bytes * grid[0]
    cost = pl.CostEstimate(
        flops=4 * m_pad * d * hdim_pad + 10 * m_pad * d,
        transcendentals=m_pad * hdim_pad + m_pad,
        bytes_accessed=int(2 * m_pad * d * x_it + weight_reads + 4 * d * 4),
    )

    vmem_limit = min(max(int(vmem_need(tm, th) * 1.2), 16 << 20), vmem_budget)

    out = pl.pallas_call(
        functools.partial(mlp_block_kernel, eps=eps),
        out_shape=jax.ShapeDtypeStruct((m_pad, d), x.dtype),
        grid_spec=pltpu.PrefetchScalarGridSpec(
            num_scalar_prefetch=0,
            grid=grid,
            in_specs=[
                pl.BlockSpec((tm, d), lambda i, k: (i, 0)),          # x row tile
                pl.BlockSpec((1, d), lambda i, k: (0, 0)),           # gamma
                pl.BlockSpec((1, d), lambda i, k: (0, 0)),           # beta
                pl.BlockSpec((None, d, th), lambda i, k: (k, 0, 0)),  # w1 slab
                pl.BlockSpec((1, th), lambda i, k: (0, k)),          # b1 H-slice
                pl.BlockSpec((th, d), lambda i, k: (k, 0)),          # w2 H-slice
                pl.BlockSpec((1, d), lambda i, k: (0, 0)),           # b2
            ],
            out_specs=pl.BlockSpec((tm, d), lambda i, k: (i, 0)),
            scratch_shapes=[
                pltpu.VMEM((tm, d), compute_dtype),   # LayerNorm output (reused over H)
                pltpu.VMEM((tm, d), jnp.float32),     # output accumulator
            ],
        ),
        compiler_params=pltpu.CompilerParams(
            dimension_semantics=("parallel", "arbitrary"),
            vmem_limit_bytes=vmem_limit,
        ),
        cost_estimate=cost,
    )(x2, gamma2, beta2, w1c, b1_2, w2c, b2_2)

    if m_pad != m:
        out = out[:m]
    return out.reshape(batch, seq, d)


def reference_f32(x, gamma, beta, w1, b1, w2, b2, eps=1e-5):
    xf = x.astype(jnp.float32)
    mean = jnp.mean(xf, axis=-1, keepdims=True)
    var = jnp.mean(jnp.square(xf - mean), axis=-1, keepdims=True)
    xn = (xf - mean) * jax.lax.rsqrt(var + eps) * gamma + beta
    h = xn @ w1 + b1
    h = 0.5 * h * (1.0 + jax.lax.erf(h / jnp.sqrt(2.0)))
    return (h @ w2 + b2).astype(x.dtype)


def reference_matched(x, gamma, beta, w1, b1, w2, b2, eps=1e-5,
                      compute_dtype=jnp.bfloat16):
    """Same math as the kernel (bf16 MXU operands, f32 accumulation)."""
    xf = x.astype(jnp.float32)
    mean = jnp.mean(xf, axis=-1, keepdims=True)
    var = jnp.mean(jnp.square(xf - mean), axis=-1, keepdims=True)
    xn = ((xf - mean) * jax.lax.rsqrt(var + eps) * gamma + beta).astype(compute_dtype)
    h = jnp.dot(xn, w1.astype(compute_dtype),
                preferred_element_type=jnp.float32) + b1
    h = 0.5 * h * (1.0 + jax.lax.erf(h * 0.7071067811865476))
    out = jnp.dot(h.astype(compute_dtype), w2.astype(compute_dtype),
                  preferred_element_type=jnp.float32) + b2
    return out.astype(x.dtype)


if __name__ == "__main__":
    # Small shapes consistent with the module (embeddings_dimension=D,
    # mlp_size=H), lane-dense so output stores are full-width vst.
    batch, seq, D, H = 2, 128, 128, 512

    key = jax.random.PRNGKey(0)
    kx, kw1, kb1, kw2, kb2 = jax.random.split(key, 5)

    x = jax.random.normal(kx, (batch, seq, D), dtype=jnp.float32)

    # Deterministic parameter init (synthetic; shapes from __init__).
    gamma = jnp.ones((D,), dtype=jnp.float32)
    beta = jnp.zeros((D,), dtype=jnp.float32)
    w1 = jax.random.normal(kw1, (D, H), dtype=jnp.float32) * 0.02   # (in, out)
    b1 = jax.random.normal(kb1, (H,), dtype=jnp.float32) * 0.02
    w2 = jax.random.normal(kw2, (H, D), dtype=jnp.float32) * 0.02   # (in, out)
    b2 = jax.random.normal(kb2, (D,), dtype=jnp.float32) * 0.02

    out = mlp_block(x, gamma, beta, w1, b1, w2, b2)
    out = jax.block_until_ready(out)
    assert out.shape == (batch, seq, D)

    # Tight check against a reference with matching bf16 MXU operands, plus a
    # looser semantic check against the full-f32 reference.
    ref_m = reference_matched(x, gamma, beta, w1, b1, w2, b2)
    ref_f = reference_f32(x, gamma, beta, w1, b1, w2, b2)
    assert jnp.allclose(out, ref_m, atol=2e-3, rtol=2e-2), (
        float(jnp.max(jnp.abs(out - ref_m))))
    assert jnp.allclose(out, ref_f, atol=1e-2, rtol=5e-2), (
        float(jnp.max(jnp.abs(out - ref_f))))

    print("KERNEL_OK")
</pallas_src>

<mosaic_0001>
module attributes {stable_mosaic.version = 11 : i64} {
  func.func @mlp_block_kernel(%arg0: i32, %arg1: i32, %arg2: memref<128x128xf32, #tpu.memory_space<vmem>>, %arg3: memref<1x128xf32, #tpu.memory_space<vmem>>, %arg4: memref<1x128xf32, #tpu.memory_space<vmem>>, %arg5: memref<1x128x512xbf16, #tpu.memory_space<vmem>>, %arg6: memref<1x512xf32, #tpu.memory_space<vmem>>, %arg7: memref<512x128xbf16, #tpu.memory_space<vmem>>, %arg8: memref<1x128xf32, #tpu.memory_space<vmem>>, %arg9: memref<128x128xf32, #tpu.memory_space<vmem>>, %arg10: memref<128x128xbf16, #tpu.memory_space<vmem>>, %arg11: memref<128x128xf32, #tpu.memory_space<vmem>>) attributes {dimension_semantics = [#tpu.dimension_semantics<parallel>, #tpu.dimension_semantics<arbitrary>], iteration_bounds = array<i64: 2, 1>, scalar_prefetch = 0 : i64, scratch_operands = 2 : i64, tpu.core_type = #tpu.core_type<tc>, window_params = [{transform_indices = @transform_0, window_bounds = array<i64: 128, 128>}, {pipeline_mode = #tpu.pipeline_mode<synchronous>, transform_indices = @transform_1, window_bounds = array<i64: 1, 128>}, {pipeline_mode = #tpu.pipeline_mode<synchronous>, transform_indices = @transform_2, window_bounds = array<i64: 1, 128>}, {transform_indices = @transform_3, window_bounds = array<i64: 1, 128, 512>}, {transform_indices = @transform_4, window_bounds = array<i64: 1, 512>}, {transform_indices = @transform_5, window_bounds = array<i64: 512, 128>}, {pipeline_mode = #tpu.pipeline_mode<synchronous>, transform_indices = @transform_6, window_bounds = array<i64: 1, 128>}, {transform_indices = @transform_7, window_bounds = array<i64: 128, 128>}]} {
    %c0_i32 = arith.constant 0 : i32
    %0 = arith.cmpi eq, %arg1, %c0_i32 : i32
    %1 = arith.extui %0 : i1 to i32
    %c0_i32_0 = arith.constant 0 : i32
    %2 = arith.cmpi ne, %1, %c0_i32_0 : i32
    scf.if %2 {
      %c0_19 = arith.constant 0 : index
      %c0_20 = arith.constant 0 : index
      %27 = vector.load %arg2[%c0_19, %c0_20] : memref<128x128xf32, #tpu.memory_space<vmem>>, vector<128x128xf32>
      %cst_21 = arith.constant dense<0.000000e+00> : vector<128xf32>
      %28 = vector.multi_reduction <add>, %27, %cst_21 [1] : vector<128x128xf32> to vector<128xf32>
      %29 = vector.shape_cast %28 : vector<128xf32> to vector<128x1xf32>
      %cst_22 = arith.constant 1.280000e+02 : f32
      %30 = vector.broadcast %cst_22 : f32 to vector<128x1xf32>
      %31 = arith.divf %29, %30 : vector<128x1xf32>
      %32 = vector.broadcast %31 : vector<128x1xf32> to vector<128x128xf32>
      %33 = arith.subf %27, %32 : vector<128x128xf32>
      %34 = arith.mulf %33, %33 : vector<128x128xf32>
      %cst_23 = arith.constant dense<0.000000e+00> : vector<128xf32>
      %35 = vector.multi_reduction <add>, %34, %cst_23 [1] : vector<128x128xf32> to vector<128xf32>
      %36 = vector.shape_cast %35 : vector<128xf32> to vector<128x1xf32>
      %cst_24 = arith.constant 1.280000e+02 : f32
      %37 = vector.broadcast %cst_24 : f32 to vector<128x1xf32>
      %38 = arith.divf %36, %37 : vector<128x1xf32>
      %39 = vector.broadcast %31 : vector<128x1xf32> to vector<128x128xf32>
      %40 = arith.subf %27, %39 : vector<128x128xf32>
      %cst_25 = arith.constant 9.99999974E-6 : f32
      %41 = vector.broadcast %cst_25 : f32 to vector<128x1xf32>
      %42 = arith.addf %38, %41 : vector<128x1xf32>
      %43 = math.rsqrt %42 : vector<128x1xf32>
      %44 = vector.broadcast %43 : vector<128x1xf32> to vector<128x128xf32>
      %45 = arith.mulf %40, %44 : vector<128x128xf32>
      %c0_26 = arith.constant 0 : index
      %c0_27 = arith.constant 0 : index
      %46 = vector.load %arg3[%c0_26, %c0_27] : memref<1x128xf32, #tpu.memory_space<vmem>>, vector<1x128xf32>
      %47 = vector.broadcast %46 : vector<1x128xf32> to vector<128x128xf32>
      %48 = arith.mulf %45, %47 : vector<128x128xf32>
      %c0_28 = arith.constant 0 : index
      %c0_29 = arith.constant 0 : index
      %49 = vector.load %arg4[%c0_28, %c0_29] : memref<1x128xf32, #tpu.memory_space<vmem>>, vector<1x128xf32>
      %50 = vector.broadcast %49 : vector<1x128xf32> to vector<128x128xf32>
      %51 = arith.addf %48, %50 : vector<128x128xf32>
      %52 = arith.truncf %51 : vector<128x128xf32> to vector<128x128xbf16>
      %c0_30 = arith.constant 0 : index
      %c0_31 = arith.constant 0 : index
      %53 = vector.load %arg10[%c0_30, %c0_31] : memref<128x128xbf16, #tpu.memory_space<vmem>>, vector<128x128xbf16>
      tpu.vector_store %arg10[%c0_30, %c0_31], %52 {strides = array<i32>} : memref<128x128xbf16, #tpu.memory_space<vmem>>, vector<128x128xbf16>,
      %cst_32 = arith.constant 0.000000e+00 : f32
      %54 = vector.broadcast %cst_32 : f32 to vector<128x128xf32>
      %c0_33 = arith.constant 0 : index
      %c0_34 = arith.constant 0 : index
      %55 = vector.load %arg8[%c0_33, %c0_34] : memref<1x128xf32, #tpu.memory_space<vmem>>, vector<1x128xf32>
      %56 = vector.broadcast %55 : vector<1x128xf32> to vector<128x128xf32>
      %57 = arith.addf %54, %56 : vector<128x128xf32>
      %c0_35 = arith.constant 0 : index
      %c0_36 = arith.constant 0 : index
      %58 = vector.load %arg11[%c0_35, %c0_36] : memref<128x128xf32, #tpu.memory_space<vmem>>, vector<128x128xf32>
      tpu.vector_store %arg11[%c0_35, %c0_36], %57 {strides = array<i32>} : memref<128x128xf32, #tpu.memory_space<vmem>>, vector<128x128xf32>,
    } else {
    }
    %c0 = arith.constant 0 : index
    %c0_1 = arith.constant 0 : index
    %3 = vector.load %arg10[%c0, %c0_1] : memref<128x128xbf16, #tpu.memory_space<vmem>>, vector<128x128xbf16>
    %c0_2 = arith.constant 0 : index
    %c0_3 = arith.constant 0 : index
    %c0_4 = arith.constant 0 : index
    %4 = vector.load %arg5[%c0_2, %c0_3, %c0_4] : memref<1x128x512xbf16, #tpu.memory_space<vmem>>, vector<1x128x512xbf16>
    %5 = vector.shape_cast %4 : vector<1x128x512xbf16> to vector<128x512xbf16>
    %cst = arith.constant dense<0.000000e+00> : vector<128x512xf32>
    %6 = tpu.matmul %3, %5, %cst {dimension_numbers = #tpu.dot_dimension_numbers<[1], [0], [0], [1], [0, 0, 1, 1], [], []>} : vector<128x128xbf16>, vector<128x512xbf16>, vector<128x512xf32> -> vector<128x512xf32>
    %c0_5 = arith.constant 0 : index
    %c0_6 = arith.constant 0 : index
    %7 = vector.load %arg6[%c0_5, %c0_6] : memref<1x512xf32, #tpu.memory_space<vmem>>, vector<1x512xf32>
    %8 = vector.broadcast %7 : vector<1x512xf32> to vector<128x512xf32>
    %9 = arith.addf %6, %8 : vector<128x512xf32>
    %cst_7 = arith.constant 5.000000e-01 : f32
    %10 = vector.broadcast %cst_7 : f32 to vector<128x512xf32>
    %11 = arith.mulf %10, %9 : vector<128x512xf32>
    %cst_8 = arith.constant 0.707106769 : f32
    %12 = vector.broadcast %cst_8 : f32 to vector<128x512xf32>
    %13 = arith.mulf %9, %12 : vector<128x512xf32>
    %14 = math.erf %13 : vector<128x512xf32>
    %cst_9 = arith.constant 1.000000e+00 : f32
    %15 = vector.broadcast %cst_9 : f32 to vector<128x512xf32>
    %16 = arith.addf %15, %14 : vector<128x512xf32>
    %17 = arith.mulf %11, %16 : vector<128x512xf32>
    %c0_10 = arith.constant 0 : index
    %c0_11 = arith.constant 0 : index
    %18 = vector.load %arg11[%c0_10, %c0_11] : memref<128x128xf32, #tpu.memory_space<vmem>>, vector<128x128xf32>
    %19 = arith.truncf %17 : vector<128x512xf32> to vector<128x512xbf16>
    %c0_12 = arith.constant 0 : index
    %c0_13 = arith.constant 0 : index
    %20 = vector.load %arg7[%c0_12, %c0_13] : memref<512x128xbf16, #tpu.memory_space<vmem>>, vector<512x128xbf16>
    %cst_14 = arith.constant dense<0.000000e+00> : vector<128x128xf32>
    %21 = tpu.matmul %19, %20, %cst_14 {dimension_numbers = #tpu.dot_dimension_numbers<[1], [0], [0], [1], [0, 0, 1, 1], [], []>} : vector<128x512xbf16>, vector<512x128xbf16>, vector<128x128xf32> -> vector<128x128xf32>
    %22 = arith.addf %18, %21 : vector<128x128xf32>
    %c0_15 = arith.constant 0 : index
    %c0_16 = arith.constant 0 : index
    %23 = vector.load %arg11[%c0_15, %c0_16] : memref<128x128xf32, #tpu.memory_space<vmem>>, vector<128x128xf32>
    tpu.vector_store %arg11[%c0_15, %c0_16], %22 {strides = array<i32>} : memref<128x128xf32, #tpu.memory_space<vmem>>, vector<128x128xf32>,
    %c0_i32_17 = arith.constant 0 : i32
    %24 = arith.cmpi eq, %arg1, %c0_i32_17 : i32
    %25 = arith.extui %24 : i1 to i32
    %c0_i32_18 = arith.constant 0 : i32
    %26 = arith.cmpi ne, %25, %c0_i32_18 : i32
    scf.if %26 {
      %c0_19 = arith.constant 0 : index
      %c0_20 = arith.constant 0 : index
      %27 = vector.load %arg11[%c0_19, %c0_20] : memref<128x128xf32, #tpu.memory_space<vmem>>, vector<128x128xf32>
      %c0_21 = arith.constant 0 : index
      %c0_22 = arith.constant 0 : index
      %28 = vector.load %arg9[%c0_21, %c0_22] : memref<128x128xf32, #tpu.memory_space<vmem>>, vector<128x128xf32>
      tpu.vector_store %arg9[%c0_21, %c0_22], %27 {strides = array<i32>} : memref<128x128xf32, #tpu.memory_space<vmem>>, vector<128x128xf32>,
    } else {
    }
    return
  }
  func.func @transform_0(%arg0: i32, %arg1: i32) -> (i32, i32) {
    %c0_i32 = arith.constant 0 : i32
    %c0_i32_0 = arith.constant 0 : i32
    return %arg0, %c0_i32 : i32, i32
  }
  func.func @transform_1(%arg0: i32, %arg1: i32) -> (i32, i32) {
    %c0_i32 = arith.constant 0 : i32
    %c0_i32_0 = arith.constant 0 : i32
    %c0_i32_1 = arith.constant 0 : i32
    return %c0_i32, %c0_i32_0 : i32, i32
  }
  func.func @transform_2(%arg0: i32, %arg1: i32) -> (i32, i32) {
    %c0_i32 = arith.constant 0 : i32
    %c0_i32_0 = arith.constant 0 : i32
    %c0_i32_1 = arith.constant 0 : i32
    return %c0_i32, %c0_i32_0 : i32, i32
  }
  func.func @transform_3(%arg0: i32, %arg1: i32) -> (i32, i32, i32) {
    %c0_i32 = arith.constant 0 : i32
    %c0_i32_0 = arith.constant 0 : i32
    %c0_i32_1 = arith.constant 0 : i32
    return %arg1, %c0_i32, %c0_i32_0 : i32, i32, i32
  }
  func.func @transform_4(%arg0: i32, %arg1: i32) -> (i32, i32) {
    %c0_i32 = arith.constant 0 : i32
    %c0_i32_0 = arith.constant 0 : i32
    return %c0_i32, %arg1 : i32, i32
  }
  func.func @transform_5(%arg0: i32, %arg1: i32) -> (i32, i32) {
    %c0_i32 = arith.constant 0 : i32
    %c0_i32_0 = arith.constant 0 : i32
    return %arg1, %c0_i32 : i32, i32
  }
  func.func @transform_6(%arg0: i32, %arg1: i32) -> (i32, i32) {
    %c0_i32 = arith.constant 0 : i32
    %c0_i32_0 = arith.constant 0 : i32
    %c0_i32_1 = arith.constant 0 : i32
    return %c0_i32, %c0_i32_0 : i32, i32
  }
  func.func @transform_7(%arg0: i32, %arg1: i32) -> (i32, i32) {
    %c0_i32 = arith.constant 0 : i32
    %c0_i32_0 = arith.constant 0 : i32
    return %arg0, %c0_i32 : i32, i32
  }
}

</mosaic_0001>

<llo_original>
// kernel: tpu_custom_call.1
$region0: #{tpu_custom_call.1}
  #allocation0 [shape = 'u32[]', space=smem, size = 0x4, offset = 0x4, fixed_abs, tag = 'smem constant byte address 0x4 - core index']
  #allocation1 [shape = 'u32[144,128]{1,0:T(1,128)}', space=vmem, size = 0x12000, scoped, tag = 'internal scratch']
  #allocation2 [shape = 'bf16[128,128]{1,0:T(16,128)(2,1)}', space=vmem, size = 0x8000, scoped, tag = 'scratch operand']
  #allocation3 [shape = 'f32[128,128]{1,0:T(8,128)}', space=vmem, size = 0x10000, scoped, tag = 'scratch operand']
  %s0 = inlined_call_operand.hbm [shape: f32[256,128], index: 0, kind: input, shape index: {}]
  %s1 = inlined_call_operand.vmem [shape: f32[1,128], index: 1, kind: input, shape index: {}]
  %s2 = inlined_call_operand.vmem [shape: f32[1,128], index: 2, kind: input, shape index: {}]
  %s3 = inlined_call_operand.hbm [shape: bf16[1,128,512], index: 3, kind: input, shape index: {}]
  %s4 = inlined_call_operand.vmem [shape: f32[1,512], index: 4, kind: input, shape index: {}]
  %s5 = inlined_call_operand.hbm [shape: bf16[512,128], index: 5, kind: input, shape index: {}]
  %s6 = inlined_call_operand.vmem [shape: f32[1,128], index: 6, kind: input, shape index: {}]
  %s7 = inlined_call_operand.hbm [shape: f32[256,128], index: 7, kind: output, shape index: {}]
  %s8 = sld [smem:[#allocation0]]
  $region81: #{tpu_custom_call.1} parent=0
    _
  %s10 = ssub.s32 1, %s8
  %s11 = scalar_select 0, %s10, %s8
  $region1: #{tpu_custom_call.1} parent=0
    #allocation4 [shape = 'u8[131072]{0}', space=vmem, size = 0x20000, scoped, tag = 'input window, operand 0']
    #allocation5 [shape = 's32[2]{0}', space=sflag, size = 0x8, scoped, tag = 'scoped memory for tpu_custom_call.1']
    #allocation6 [shape = 's32[2]{0}', space=sflag, size = 0x8, scoped, tag = 'scoped memory for tpu_custom_call.1']
    #allocation7 [shape = 'u8[131072]{0}', space=vmem, size = 0x20000, scoped, tag = 'input window, operand 3, single buffered']
    #allocation8 [shape = 's32[1]{0}', space=sflag, size = 0x4, scoped, tag = 'scoped memory for tpu_custom_call.1']
    #allocation9 [shape = 'u8[131072]{0}', space=vmem, size = 0x20000, scoped, tag = 'input window, operand 5, single buffered']
    #allocation10 [shape = 'u8[131072]{0}', space=vmem, size = 0x20000, scoped, tag = 'output window, operand 0']
    %12 = vsyncpa [#allocation5], 0
    %s13 = scalar_lea.sflag [#allocation5], 1
    %14 = vsyncpa %s13, 0
    %15 = vsyncpa [#allocation8], 0
    %16 = vsyncpa [#allocation6], 0
    %s17 = scalar_lea.sflag [#allocation6], 1
    %18 = vsyncpa %s17, 0
    loop: start=0, step=1, limit=4
    $region2: #{tpu_custom_call.1} parent=1 // loop_pre_header
      _
    $region3: #{tpu_custom_call.1} parent=1 // loop_header
      %s20 = sphi 0, %s24
      %p21 = scmp.ge.s32.totalorder %s20, 4
      %s27 = sphi 0, %s39
      %s28 = sphi 0, %s35
      %s29 = sphi 0, %s27
      %s30 = sphi 0, %s28
      %s31 = sphi 0, %s29
      %s32 = sphi 0, %s30
      %s42 = sphi 0, %s44
      %s45 = sphi 0, %s42
      %s46 = sphi 0, %s45
      %s62 = sphi 0, %s46
      %s66 = sphi 0, %s66
      %s68 = sphi 0, %s66
      %s69 = sphi 0, %s68
      %s83 = sphi 0, %s69
      %s87 = sphi 0, %s87
      %s89 = sphi 0, %s87
      %s90 = sphi 0, %s89
      %s104 = sphi 0, %s90
      %s110 = sphi 0, %s112
      %s113 = sphi 0, %s110
      %s114 = sphi 0, %s113
      %s130 = sphi 0, %s114
      %s136 = sphi 0, %s138
      %s139 = sphi 0, %s136
      %s140 = sphi 0, %s139
      %s156 = sphi 0, %s140
      %s162 = sphi 0, %s164
      %s165 = sphi 0, %s162
      %s166 = sphi 0, %s165
      %s182 = sphi 0, %s166
      %s186 = sphi 0, %s186
      %s188 = sphi 0, %s186
      %s189 = sphi 0, %s188
      %s203 = sphi 0, %s189
      %s209 = sphi 0, %s211
      %s212 = sphi 0, %s209
      %s213 = sphi 0, %s212
      %s229 = sphi 0, %s213
    $region4: #{tpu_custom_call.1} parent=1 // loop_header_branch
      %23 = sbr.rel (%p21) target = $region8
    $region5: #{tpu_custom_call.1} parent=1 // loop_body
      %s25 = ssub.s32 %s20, 1
      %s26 = ssub.s32 %s20, 2
      %s33 = sadd.s32 1, %s28
      %p34 = scmp.ge.s32.totalorder %s33, 1
      %s35 = scalar_select %p34, 0, %s33
      %s36 = sadd.s32 1, %s27
      %s37 = scalar_select %p34, %s36, %s27
      %p38 = scmp.ge.s32.totalorder %s37, 2
      %s39 = scalar_select %p38, 0, %s37
      %s40 = ssub.s32 %s27, %s39
      %p41 = scmp.eq.s32.totalorder %s40, 0
      %s43 = sadd.s32 %s42, 1
      %s44 = scalar_select %p41, %s42, %s43
      %p47 = pneg %p41
      %p48 = scmp.eq.s32.totalorder %s20, 1
      %p49 = por %p47, %p48
      %p50 = scmp.ne.s32.totalorder %s42, %s45
      %p51 = scmp.eq.s32.totalorder %s20, 0
      %p52 = por %p50, %p51
      %p53 = scmp.ne.s32.totalorder %s42, %s45
      %p54 = scmp.eq.s32.totalorder %s25, 1
      %p55 = por %p53, %p54
      %p56 = scmp.ne.s32.totalorder %s45, %s46
      %p57 = scmp.eq.s32.totalorder %s25, 0
      %p58 = por %p56, %p57
      %p59 = scmp.ne.s32.totalorder %s45, %s46
      %p60 = scmp.eq.s32.totalorder %s26, 1
      %p61 = por %p59, %p60
      %p63 = scmp.ne.s32.totalorder %s46, %s62
      %p64 = scmp.eq.s32.totalorder %s26, 0
      %p65 = por %p63, %p64
      %s67 = sadd.s32 %s66, 1
      %p70 = scmp.eq.s32.totalorder %s20, 1
      %p71 = scmp.ne.s32.totalorder %s66, %s68
      %p72 = scmp.eq.s32.totalorder %s20, 0
      %p73 = por %p71, %p72
      %p74 = scmp.ne.s32.totalorder %s66, %s68
      %p75 = scmp.eq.s32.totalorder %s25, 1
      %p76 = por %p74, %p75
      %p77 = scmp.ne.s32.totalorder %s68, %s69
      %p78 = scmp.eq.s32.totalorder %s25, 0
      %p79 = por %p77, %p78
      %p80 = scmp.ne.s32.totalorder %s68, %s69
      %p81 = scmp.eq.s32.totalorder %s26, 1
      %p82 = por %p80, %p81
      %p84 = scmp.ne.s32.totalorder %s69, %s83
      %p85 = scmp.eq.s32.totalorder %s26, 0
      %p86 = por %p84, %p85
      %s88 = sadd.s32 %s87, 1
      %p91 = scmp.eq.s32.totalorder %s20, 1
      %p92 = scmp.ne.s32.totalorder %s87, %s89
      %p93 = scmp.eq.s32.totalorder %s20, 0
      %p94 = por %p92, %p93
      %p95 = scmp.ne.s32.totalorder %s87, %s89
      %p96 = scmp.eq.s32.totalorder %s25, 1
      %p97 = por %p95, %p96
      %p98 = scmp.ne.s32.totalorder %s89, %s90
      %p99 = scmp.eq.s32.totalorder %s25, 0
      %p100 = por %p98, %p99
      %p101 = scmp.ne.s32.totalorder %s89, %s90
      %p102 = scmp.eq.s32.totalorder %s26, 1
      %p103 = por %p101, %p102
      %p105 = scmp.ne.s32.totalorder %s90, %s104
      %p106 = scmp.eq.s32.totalorder %s26, 0
      %p107 = por %p105, %p106
      %s108 = ssub.s32 %s28, %s35
      %p109 = scmp.eq.s32.totalorder %s108, 0
      %s111 = sadd.s32 %s110, 1
      %s112 = scalar_select %p109, %s110, %s111
      %p115 = pneg %p109
      %p116 = scmp.eq.s32.totalorder %s20, 1
      %p117 = por %p115, %p116
      %p118 = scmp.ne.s32.totalorder %s110, %s113
      %p119 = scmp.eq.s32.totalorder %s20, 0
      %p120 = por %p118, %p119
      %p121 = scmp.ne.s32.totalorder %s110, %s113
      %p122 = scmp.eq.s32.totalorder %s25, 1
      %p123 = por %p121, %p122
      %p124 = scmp.ne.s32.totalorder %s113, %s114
      %p125 = scmp.eq.s32.totalorder %s25, 0
      %p126 = por %p124, %p125
      %p127 = scmp.ne.s32.totalorder %s113, %s114
      %p128 = scmp.eq.s32.totalorder %s26, 1
      %p129 = por %p127, %p128
      %p131 = scmp.ne.s32.totalorder %s114, %s130
      %p132 = scmp.eq.s32.totalorder %s26, 0
      %p133 = por %p131, %p132
      %s134 = ssub.s32 %s28, %s35
      %p135 = scmp.eq.s32.totalorder %s134, 0
      %s137 = sadd.s32 %s136, 1
      %s138 = scalar_select %p135, %s136, %s137
      %p141 = pneg %p135
      %p142 = scmp.eq.s32.totalorder %s20, 1
      %p143 = por %p141, %p142
      %p144 = scmp.ne.s32.totalorder %s136, %s139
      %p145 = scmp.eq.s32.totalorder %s20, 0
      %p146 = por %p144, %p145
      %p147 = scmp.ne.s32.totalorder %s136, %s139
      %p148 = scmp.eq.s32.totalorder %s25, 1
      %p149 = por %p147, %p148
      %p150 = scmp.ne.s32.totalorder %s139, %s140
      %p151 = scmp.eq.s32.totalorder %s25, 0
      %p152 = por %p150, %p151
      %p153 = scmp.ne.s32.totalorder %s139, %s140
      %p154 = scmp.eq.s32.totalorder %s26, 1
      %p155 = por %p153, %p154
      %p157 = scmp.ne.s32.totalorder %s140, %s156
      %p158 = scmp.eq.s32.totalorder %s26, 0
      %p159 = por %p157, %p158
      %s160 = ssub.s32 %s28, %s35
      %p161 = scmp.eq.s32.totalorder %s160, 0
      %s163 = sadd.s32 %s162, 1
      %s164 = scalar_select %p161, %s162, %s163
      %p167 = pneg %p161
      %p168 = scmp.eq.s32.totalorder %s20, 1
      %p169 = por %p167, %p168
      %p170 = scmp.ne.s32.totalorder %s162, %s165
      %p171 = scmp.eq.s32.totalorder %s20, 0
      %p172 = por %p170, %p171
      %p173 = scmp.ne.s32.totalorder %s162, %s165
      %p174 = scmp.eq.s32.totalorder %s25, 1
      %p175 = por %p173, %p174
      %p176 = scmp.ne.s32.totalorder %s165, %s166
      %p177 = scmp.eq.s32.totalorder %s25, 0
      %p178 = por %p176, %p177
      %p179 = scmp.ne.s32.totalorder %s165, %s166
      %p180 = scmp.eq.s32.totalorder %s26, 1
      %p181 = por %p179, %p180
      %p183 = scmp.ne.s32.totalorder %s166, %s182
      %p184 = scmp.eq.s32.totalorder %s26, 0
      %p185 = por %p183, %p184
      %s187 = sadd.s32 %s186, 1
      %p190 = scmp.eq.s32.totalorder %s20, 1
      %p191 = scmp.ne.s32.totalorder %s186, %s188
      %p192 = scmp.eq.s32.totalorder %s20, 0
      %p193 = por %p191, %p192
      %p194 = scmp.ne.s32.totalorder %s186, %s188
      %p195 = scmp.eq.s32.totalorder %s25, 1
      %p196 = por %p194, %p195
      %p197 = scmp.ne.s32.totalorder %s188, %s189
      %p198 = scmp.eq.s32.totalorder %s25, 0
      %p199 = por %p197, %p198
      %p200 = scmp.ne.s32.totalorder %s188, %s189
      %p201 = scmp.eq.s32.totalorder %s26, 1
      %p202 = por %p200, %p201
      %p204 = scmp.ne.s32.totalorder %s189, %s203
      %p205 = scmp.eq.s32.totalorder %s26, 0
      %p206 = por %p204, %p205
      %s207 = ssub.s32 %s27, %s39
      %p208 = scmp.eq.s32.totalorder %s207, 0
      %s210 = sadd.s32 %s209, 1
      %s211 = scalar_select %p208, %s209, %s210
      %p214 = pneg %p208
      %p215 = scmp.eq.s32.totalorder %s20, 1
      %p216 = por %p214, %p215
      %p217 = scmp.ne.s32.totalorder %s209, %s212
      %p218 = scmp.eq.s32.totalorder %s20, 0
      %p219 = por %p217, %p218
      %p220 = scmp.ne.s32.totalorder %s209, %s212
      %p221 = scmp.eq.s32.totalorder %s25, 1
      %p222 = por %p220, %p221
      %p223 = scmp.ne.s32.totalorder %s212, %s213
      %p224 = scmp.eq.s32.totalorder %s25, 0
      %p225 = por %p223, %p224
      %p226 = scmp.ne.s32.totalorder %s212, %s213
      %p227 = scmp.eq.s32.totalorder %s26, 1
      %p228 = por %p226, %p227
      %p230 = scmp.ne.s32.totalorder %s213, %s229
      %p231 = scmp.eq.s32.totalorder %s26, 0
      %p232 = por %p230, %p231
      %p233 = scmp.le.s32.totalorder 1, %s20
      %p234 = scmp.lt.s32.totalorder %s20, 3
      %p235 = pnand %p233, %p234
      %p236 = pneg %p235
      // Predicated region
      $region9: #{tpu_custom_call.1} parent=5 // pred_check
        _
      $region10: #{tpu_custom_call.1} parent=5 // pred_check_branch
        %238 = sbr.rel (%p235) target = $region12
      $region11: #{tpu_custom_call.1} parent=5 // pred_region
        %s239 = ssub.s32 %s20, 1
        // Predicated region
        $region13: #{tpu_custom_call.1} parent=11 // pred_check
          %p240 = pneg %p79
        $region14: #{tpu_custom_call.1} parent=11 // pred_check_branch
          %242 = sbr.rel (%p240) target = $region16
        $region15: #{tpu_custom_call.1} parent=11 // pred_region
          _
        $region16: #{tpu_custom_call.1} parent=11 // pred_fallthru
          _
        // Predicated region
        $region17: #{tpu_custom_call.1} parent=11 // pred_check
          %p243 = pneg %p100
        $region18: #{tpu_custom_call.1} parent=11 // pred_check_branch
          %245 = sbr.rel (%p243) target = $region20
        $region19: #{tpu_custom_call.1} parent=11 // pred_region
          _
        $region20: #{tpu_custom_call.1} parent=11 // pred_fallthru
          _
        // Predicated region
        $region21: #{tpu_custom_call.1} parent=11 // pred_check
          %p246 = pneg %p126
        $region22: #{tpu_custom_call.1} parent=11 // pred_check_branch
          %248 = sbr.rel (%p246) target = $region24
        $region23: #{tpu_custom_call.1} parent=11 // pred_region
          %s250 = ssub.s32 4096, 4096
          %251 = vsyncadd [#allocation8], %s250
          %s252 = smul.addr %s30, 64
          %s253 = smul.addr %s252, 64
          %s254 = scalar_lea.hbm %s3, %s253
          %s255 = sshll.u32 [#allocation7], 4
          %s256 = int_to_ptr.vmem [resolvable:$true] %s255
          %261 = dma.hbm_to_vmem [thread:$0]  %s254, 4096, %s256, [#allocation8], 256, 256, 16
        $region24: #{tpu_custom_call.1} parent=11 // pred_fallthru
          _
        // Predicated region
        $region25: #{tpu_custom_call.1} parent=11 // pred_check
          %p262 = pneg %p152
        $region26: #{tpu_custom_call.1} parent=11 // pred_check_branch
          %264 = sbr.rel (%p262) target = $region28
        $region27: #{tpu_custom_call.1} parent=11 // pred_region
          %s265 = smul.u32 4, %s30
          %p266 = scmp.lt.s32.totalorder %s265, 3
          %s267 = scalar_select %p266, %s265, 3
          %s268 = scalar_lea.vmem %s4, %s267
          %s269 = smul.u32 4, %s30
        $region28: #{tpu_custom_call.1} parent=11 // pred_fallthru
          _
        // Predicated region
        $region29: #{tpu_custom_call.1} parent=11 // pred_check
          %p270 = pneg %p178
        $region30: #{tpu_custom_call.1} parent=11 // pred_check_branch
          %272 = sbr.rel (%p270) target = $region32
        $region31: #{tpu_custom_call.1} parent=11 // pred_region
          %s273 = smul.u32 64, %s30
          %s275 = ssub.s32 4096, 4096
          %276 = vsyncadd [#allocation8], %s275
          %s277 = smul.addr %s273, 64
          %s278 = scalar_lea.hbm %s5, %s277
          %s279 = sshll.u32 [#allocation9], 4
          %s280 = int_to_ptr.vmem [resolvable:$true] %s279
          %285 = dma.hbm_to_vmem [thread:$0]  %s278, 4096, %s280, [#allocation8], 64, 64, 4
        $region32: #{tpu_custom_call.1} parent=11 // pred_fallthru
          _
        // Predicated region
        $region33: #{tpu_custom_call.1} parent=11 // pred_check
          %p286 = pneg %p199
        $region34: #{tpu_custom_call.1} parent=11 // pred_check_branch
          %288 = sbr.rel (%p286) target = $region36
        $region35: #{tpu_custom_call.1} parent=11 // pred_region
          _
        $region36: #{tpu_custom_call.1} parent=11 // pred_fallthru
          _
      $region12: #{tpu_custom_call.1} parent=5 // pred_fallthru
        _
      %p289 = scmp.lt.s32.totalorder %s20, 2
      // Predicated region
      $region37: #{tpu_custom_call.1} parent=5 // pred_check
        %p290 = pneg %p289
      $region38: #{tpu_custom_call.1} parent=5 // pred_check_branch
        %292 = sbr.rel (%p290) target = $region40
      $region39: #{tpu_custom_call.1} parent=5 // pred_region
        // Predicated region
        $region41: #{tpu_custom_call.1} parent=39 // pred_check
          %p293 = pneg %p52
        $region42: #{tpu_custom_call.1} parent=39 // pred_check_branch
          %295 = sbr.rel (%p293) target = $region44
        $region43: #{tpu_custom_call.1} parent=39 // pred_region
          %s296 = sand.u32 %s42, 1
          %s297 = scalar_lea.sflag [#allocation5], %s296
          %s298 = sand.u32 %s42, 1
          %s299 = smul.addr %s298, 128
          %s300 = scalar_lea.vmem [#allocation4], %s299
          %s301 = smul.u32 16, %s27
          %s303 = ssub.s32 2048, 2048
          %304 = vsyncadd %s297, %s303
          %s305 = smul.addr %s301, 128
          %s306 = scalar_lea.hbm %s0, %s305
          %s307 = sshll.u32 %s300, 4
          %s308 = int_to_ptr.vmem [resolvable:$true] %s307
          %313 = dma.hbm_to_vmem [thread:$0]  %s306, 2048, %s308, %s297, 128, 128, 8
        $region44: #{tpu_custom_call.1} parent=39 // pred_fallthru
          _
      $region40: #{tpu_custom_call.1} parent=5 // pred_fallthru
        _
      %p314 = scmp.le.s32.totalorder 1, %s20
      %p315 = scmp.lt.s32.totalorder %s20, 3
      %p316 = pnand %p314, %p315
      %p317 = pneg %p316
      // Predicated region
      $region45: #{tpu_custom_call.1} parent=5 // pred_check
        _
      $region46: #{tpu_custom_call.1} parent=5 // pred_check_branch
        %319 = sbr.rel (%p316) target = $region48
      $region47: #{tpu_custom_call.1} parent=5 // pred_region
        %s320 = ssub.s32 %s20, 1
        %s321 = sand.u32 %s45, 1
        %s322 = scalar_lea.sflag [#allocation5], %s321
        %s323 = sand.u32 %s45, 1
        %s324 = smul.addr %s323, 128
        %s325 = scalar_lea.vmem [#allocation4], %s324
        // Predicated region
        $region49: #{tpu_custom_call.1} parent=47 // pred_check
          %p326 = pneg %p58
        $region50: #{tpu_custom_call.1} parent=47 // pred_check_branch
          %328 = sbr.rel (%p326) target = $region52
        $region51: #{tpu_custom_call.1} parent=47 // pred_region
          %329 = dma.done %s322, 2048
        $region52: #{tpu_custom_call.1} parent=47 // pred_fallthru
          _
        // Predicated region
        $region53: #{tpu_custom_call.1} parent=47 // pred_check
          %p330 = pneg %p126
        $region54: #{tpu_custom_call.1} parent=47 // pred_check_branch
          %332 = sbr.rel (%p330) target = $region56
        $region55: #{tpu_custom_call.1} parent=47 // pred_region
          %333 = dma.done [#allocation8], 4096
        $region56: #{tpu_custom_call.1} parent=47 // pred_fallthru
          _
        // Predicated region
        $region57: #{tpu_custom_call.1} parent=47 // pred_check
          %p334 = pneg %p178
        $region58: #{tpu_custom_call.1} parent=47 // pred_check_branch
          %336 = sbr.rel (%p334) target = $region60
        $region59: #{tpu_custom_call.1} parent=47 // pred_region
          %337 = dma.done [#allocation8], 4096
        $region60: #{tpu_custom_call.1} parent=47 // pred_fallthru
          _
        %s338 = sand.u32 %s45, 1
        %s339 = scalar_lea.sflag [#allocation5], %s338
        %s340 = sand.u32 %s45, 1
        %s341 = smul.addr %s340, 128
        %s342 = scalar_lea.vmem [#allocation4], %s341
        %p343 = pneg %p58
        %p344 = pneg %p55
        %p345 = pneg %p79
        %p346 = pneg %p76
        %p347 = pneg %p100
        %p348 = pneg %p97
        %p349 = pneg %p126
        %p350 = pneg %p123
        %s351 = smul.u32 4, %s30
        %p352 = scmp.lt.s32.totalorder %s351, 3
        %s353 = scalar_select %p352, %s351, 3
        %s354 = scalar_lea.vmem %s4, %s353
        %p355 = pneg %p152
        %p356 = pneg %p149
        %p357 = pneg %p178
        %p358 = pneg %p175
        %p359 = pneg %p199
        %p360 = pneg %p196
        %p361 = pneg %p225
        %p362 = pneg %p222
        %s363 = sand.u32 %s212, 1
        %s364 = scalar_lea.sflag [#allocation6], %s363
        %s365 = sand.u32 %s212, 1
        %s366 = smul.addr %s365, 128
        %s367 = scalar_lea.vmem [#allocation10], %s366
        %s368 = smul.u32 16, %s29
        %s369 = smul.u32 4, %s30
        %p370 = scmp.lt.s32.totalorder %s369, 3
        %s371 = scalar_select %p370, %s369, 3
        %s372 = scalar_lea.vmem %s4, %s371
        %s373 = smul.u32 4, %s30
        %s374 = smul.u32 64, %s30
        %s375 = smul.u32 16, %s29
        %p377 = scmp.eq.s32.totalorder %s30, 0
        // Predicated region
        $region61: #{tpu_custom_call.1} parent=47 // pred_check
          %p378 = pneg %p377
        $region62: #{tpu_custom_call.1} parent=47 // pred_check_branch
          %380 = sbr.rel (%p378) target = $region64
        $region63: #{tpu_custom_call.1} parent=47 // pred_region
          %v381 = vld [vmem:[%s325] sm:$0xff]
          %v382 = vld [vmem:[%s325 + $0x8] sm:$0xff]
          %v383 = vld [vmem:[%s325 + $0x10] sm:$0xff]
          %v384 = vld [vmem:[%s325 + $0x18] sm:$0xff]
          %v385 = vld [vmem:[%s325 + $0x20] sm:$0xff]
          %v386 = vld [vmem:[%s325 + $0x28] sm:$0xff]
          %v387 = vld [vmem:[%s325 + $0x30] sm:$0xff]
          %v388 = vld [vmem:[%s325 + $0x38] sm:$0xff]
          %v389 = vld [vmem:[%s325 + $0x40] sm:$0xff]
          %v390 = vld [vmem:[%s325 + $0x48] sm:$0xff]
          %v391 = vld [vmem:[%s325 + $0x50] sm:$0xff]
          %v392 = vld [vmem:[%s325 + $0x58] sm:$0xff]
          %v393 = vld [vmem:[%s325 + $0x60] sm:$0xff]
          %v394 = vld [vmem:[%s325 + $0x68] sm:$0xff]
          %v395 = vld [vmem:[%s325 + $0x70] sm:$0xff]
          %v396 = vld [vmem:[%s325 + $0x78] sm:$0xff]
          %397 = vadd.xlane.f32.xlu0 %v381
          %v398 = vpop.xlane.xlu0 %397
          %399 = vadd.xlane.f32.xlu0 %v382
          %v400 = vpop.xlane.xlu0 %399
          %401 = vadd.xlane.f32.xlu0 %v383
          %v402 = vpop.xlane.xlu0 %401
          %403 = vadd.xlane.f32.xlu0 %v384
          %v404 = vpop.xlane.xlu0 %403
          %405 = vadd.xlane.f32.xlu0 %v385
          %v406 = vpop.xlane.xlu0 %405
          %407 = vadd.xlane.f32.xlu0 %v386
          %v408 = vpop.xlane.xlu0 %407
          %409 = vadd.xlane.f32.xlu0 %v387
          %v410 = vpop.xlane.xlu0 %409
          %411 = vadd.xlane.f32.xlu0 %v388
          %v412 = vpop.xlane.xlu0 %411
          %413 = vadd.xlane.f32.xlu0 %v389
          %v414 = vpop.xlane.xlu0 %413
          %415 = vadd.xlane.f32.xlu0 %v390
          %v416 = vpop.xlane.xlu0 %415
          %417 = vadd.xlane.f32.xlu0 %v391
          %v418 = vpop.xlane.xlu0 %417
          %419 = vadd.xlane.f32.xlu0 %v392
          %v420 = vpop.xlane.xlu0 %419
          %421 = vadd.xlane.f32.xlu0 %v393
          %v422 = vpop.xlane.xlu0 %421
          %423 = vadd.xlane.f32.xlu0 %v394
          %v424 = vpop.xlane.xlu0 %423
          %425 = vadd.xlane.f32.xlu0 %v395
          %v426 = vpop.xlane.xlu0 %425
          %427 = vadd.xlane.f32.xlu0 %v396
          %v428 = vpop.xlane.xlu0 %427
          %v429 = vrcp.pop 128.0
          %v430 = vmul.f32 %v398, %v429
          %v431 = vmul.f32 %v400, %v429
          %v432 = vmul.f32 %v402, %v429
          %v433 = vmul.f32 %v404, %v429
          %v434 = vmul.f32 %v406, %v429
          %v435 = vmul.f32 %v408, %v429
          %v436 = vmul.f32 %v410, %v429
          %v437 = vmul.f32 %v412, %v429
          %v438 = vmul.f32 %v414, %v429
          %v439 = vmul.f32 %v416, %v429
          %v440 = vmul.f32 %v418, %v429
          %v441 = vmul.f32 %v420, %v429
          %v442 = vmul.f32 %v422, %v429
          %v443 = vmul.f32 %v424, %v429
          %v444 = vmul.f32 %v426, %v429
          %v445 = vmul.f32 %v428, %v429
          %v446 = vsub.f32 %v381, %v430
          %v447 = vsub.f32 %v382, %v431
          %v448 = vsub.f32 %v383, %v432
          %v449 = vsub.f32 %v384, %v433
          %v450 = vsub.f32 %v385, %v434
          %v451 = vsub.f32 %v386, %v435
          %v452 = vsub.f32 %v387, %v436
          %v453 = vsub.f32 %v388, %v437
          %v454 = vsub.f32 %v389, %v438
          %v455 = vsub.f32 %v390, %v439
          %v456 = vsub.f32 %v391, %v440
          %v457 = vsub.f32 %v392, %v441
          %v458 = vsub.f32 %v393, %v442
          %v459 = vsub.f32 %v394, %v443
          %v460 = vsub.f32 %v395, %v444
          %v461 = vsub.f32 %v396, %v445
          %v462 = vmul.f32 %v446, %v446
          %v463 = vmul.f32 %v447, %v447
          %v464 = vmul.f32 %v448, %v448
          %v465 = vmul.f32 %v449, %v449
          %v466 = vmul.f32 %v450, %v450
          %v467 = vmul.f32 %v451, %v451
          %v468 = vmul.f32 %v452, %v452
          %v469 = vmul.f32 %v453, %v453
          %v470 = vmul.f32 %v454, %v454
          %v471 = vmul.f32 %v455, %v455
          %v472 = vmul.f32 %v456, %v456
          %v473 = vmul.f32 %v457, %v457
          %v474 = vmul.f32 %v458, %v458
          %v475 = vmul.f32 %v459, %v459
          %v476 = vmul.f32 %v460, %v460
          %v477 = vmul.f32 %v461, %v461
          %478 = vadd.xlane.f32.xlu0 %v462
          %v479 = vpop.xlane.xlu0 %478
          %480 = vadd.xlane.f32.xlu0 %v463
          %v481 = vpop.xlane.xlu0 %480
          %482 = vadd.xlane.f32.xlu0 %v464
          %v483 = vpop.xlane.xlu0 %482
          %484 = vadd.xlane.f32.xlu0 %v465
          %v485 = vpop.xlane.xlu0 %484
          %486 = vadd.xlane.f32.xlu0 %v466
          %v487 = vpop.xlane.xlu0 %486
          %488 = vadd.xlane.f32.xlu0 %v467
          %v489 = vpop.xlane.xlu0 %488
          %490 = vadd.xlane.f32.xlu0 %v468
          %v491 = vpop.xlane.xlu0 %490
          %492 = vadd.xlane.f32.xlu0 %v469
          %v493 = vpop.xlane.xlu0 %492
          %494 = vadd.xlane.f32.xlu0 %v470
          %v495 = vpop.xlane.xlu0 %494
          %496 = vadd.xlane.f32.xlu0 %v471
          %v497 = vpop.xlane.xlu0 %496
          %498 = vadd.xlane.f32.xlu0 %v472
          %v499 = vpop.xlane.xlu0 %498
          %500 = vadd.xlane.f32.xlu0 %v473
          %v501 = vpop.xlane.xlu0 %500
          %502 = vadd.xlane.f32.xlu0 %v474
          %v503 = vpop.xlane.xlu0 %502
          %504 = vadd.xlane.f32.xlu0 %v475
          %v505 = vpop.xlane.xlu0 %504
          %506 = vadd.xlane.f32.xlu0 %v476
          %v507 = vpop.xlane.xlu0 %506
          %508 = vadd.xlane.f32.xlu0 %v477
          %v509 = vpop.xlane.xlu0 %508
          %v510 = vmul.f32 %v479, %v429
          %v511 = vmul.f32 %v481, %v429
          %v512 = vmul.f32 %v483, %v429
          %v513 = vmul.f32 %v485, %v429
          %v514 = vmul.f32 %v487, %v429
          %v515 = vmul.f32 %v489, %v429
          %v516 = vmul.f32 %v491, %v429
          %v517 = vmul.f32 %v493, %v429
          %v518 = vmul.f32 %v495, %v429
          %v519 = vmul.f32 %v497, %v429
          %v520 = vmul.f32 %v499, %v429
          %v521 = vmul.f32 %v501, %v429
          %v522 = vmul.f32 %v503, %v429
          %v523 = vmul.f32 %v505, %v429
          %v524 = vmul.f32 %v507, %v429
          %v525 = vmul.f32 %v509, %v429
          %v526 = vadd.f32 %v510, 1e-05
          %v527 = vadd.f32 %v511, 1e-05
          %v528 = vadd.f32 %v512, 1e-05
          %v529 = vadd.f32 %v513, 1e-05
          %v530 = vadd.f32 %v514, 1e-05
          %v531 = vadd.f32 %v515, 1e-05
          %v532 = vadd.f32 %v516, 1e-05
          %v533 = vadd.f32 %v517, 1e-05
          %v534 = vadd.f32 %v518, 1e-05
          %v535 = vadd.f32 %v519, 1e-05
          %v536 = vadd.f32 %v520, 1e-05
          %v537 = vadd.f32 %v521, 1e-05
          %v538 = vadd.f32 %v522, 1e-05
          %v539 = vadd.f32 %v523, 1e-05
          %v540 = vadd.f32 %v524, 1e-05
          %v541 = vadd.f32 %v525, 1e-05
          %v542 = vrsqrt.pop %v526
          %v543 = vrsqrt.pop %v527
          %v544 = vrsqrt.pop %v528
          %v545 = vrsqrt.pop %v529
          %v546 = vrsqrt.pop %v530
          %v547 = vrsqrt.pop %v531
          %v548 = vrsqrt.pop %v532
          %v549 = vrsqrt.pop %v533
          %v550 = vrsqrt.pop %v534
          %v551 = vrsqrt.pop %v535
          %v552 = vrsqrt.pop %v536
          %v553 = vrsqrt.pop %v537
          %v554 = vrsqrt.pop %v538
          %v555 = vrsqrt.pop %v539
          %v556 = vrsqrt.pop %v540
          %v557 = vrsqrt.pop %v541
          %v558 = vmul.f32 %v446, %v542
          %v559 = vmul.f32 %v447, %v543
          %v560 = vmul.f32 %v448, %v544
          %v561 = vmul.f32 %v449, %v545
          %v562 = vmul.f32 %v450, %v546
          %v563 = vmul.f32 %v451, %v547
          %v564 = vmul.f32 %v452, %v548
          %v565 = vmul.f32 %v453, %v549
          %v566 = vmul.f32 %v454, %v550
          %v567 = vmul.f32 %v455, %v551
          %v568 = vmul.f32 %v456, %v552
          %v569 = vmul.f32 %v457, %v553
          %v570 = vmul.f32 %v458, %v554
          %v571 = vmul.f32 %v459, %v555
          %v572 = vmul.f32 %v460, %v556
          %v573 = vmul.f32 %v461, %v557
          %v574 = vld [vmem:[%s1] sm:$0x1]
          %v576 = vlaneseq
          %v577 = vshrl.u32 %v576, 7
          %v578 = vsub.s32 0, %v577
          %v579 = vrot.slane %v574, %v578
          %v581 = vmul.f32 %v558, %v579
          %v582 = vmul.f32 %v559, %v579
          %v583 = vmul.f32 %v560, %v579
          %v584 = vmul.f32 %v561, %v579
          %v585 = vmul.f32 %v562, %v579
          %v586 = vmul.f32 %v563, %v579
          %v587 = vmul.f32 %v564, %v579
          %v588 = vmul.f32 %v565, %v579
          %v589 = vmul.f32 %v566, %v579
          %v590 = vmul.f32 %v567, %v579
          %v591 = vmul.f32 %v568, %v579
          %v592 = vmul.f32 %v569, %v579
          %v593 = vmul.f32 %v570, %v579
          %v594 = vmul.f32 %v571, %v579
          %v595 = vmul.f32 %v572, %v579
          %v596 = vmul.f32 %v573, %v579
          %v597 = vld [vmem:[%s2] sm:$0x1]
          %v599 = vlaneseq
          %v600 = vshrl.u32 %v599, 7
          %v601 = vsub.s32 0, %v600
          %v602 = vrot.slane %v597, %v601
          %v604 = vadd.f32 %v581, %v602
          %v605 = vadd.f32 %v582, %v602
          %v606 = vadd.f32 %v583, %v602
          %v607 = vadd.f32 %v584, %v602
          %v608 = vadd.f32 %v585, %v602
          %v609 = vadd.f32 %v586, %v602
          %v610 = vadd.f32 %v587, %v602
          %v611 = vadd.f32 %v588, %v602
          %v612 = vadd.f32 %v589, %v602
          %v613 = vadd.f32 %v590, %v602
          %v614 = vadd.f32 %v591, %v602
          %v615 = vadd.f32 %v592, %v602
          %v616 = vadd.f32 %v593, %v602
          %v617 = vadd.f32 %v594, %v602
          %v618 = vadd.f32 %v595, %v602
          %v619 = vadd.f32 %v596, %v602
          %v620 = vpack.c.bf16 %v605, %v604
          %v621 = vpack.c.bf16 %v607, %v606
          %v622 = vpack.c.bf16 %v609, %v608
          %v623 = vpack.c.bf16 %v611, %v610
          %v624 = vpack.c.bf16 %v613, %v612
          %v625 = vpack.c.bf16 %v615, %v614
          %v626 = vpack.c.bf16 %v617, %v616
          %v627 = vpack.c.bf16 %v619, %v618
          %628 = vst [vmem:[#allocation2] sm:$0xff] %v620
          %629 = vst [vmem:[#allocation2 + $0x8] sm:$0xff] %v621
          %630 = vst [vmem:[#allocation2 + $0x10] sm:$0xff] %v622
          %631 = vst [vmem:[#allocation2 + $0x18] sm:$0xff] %v623
          %632 = vst [vmem:[#allocation2 + $0x20] sm:$0xff] %v624
          %633 = vst [vmem:[#allocation2 + $0x28] sm:$0xff] %v625
          %634 = vst [vmem:[#allocation2 + $0x30] sm:$0xff] %v626
          %635 = vst [vmem:[#allocation2 + $0x38] sm:$0xff] %v627
          %v636 = vld [vmem:[%s6] sm:$0x1]
          %v638 = vlaneseq
          %v639 = vshrl.u32 %v638, 7
          %v640 = vsub.s32 0, %v639
          %v641 = vrot.slane %v636, %v640
          %v643 = vadd.f32 %v641, 0.0
          %644 = vst [vmem:[#allocation3] sm:$0xff] %v643
          %645 = vst [vmem:[#allocation3 + $0x8] sm:$0xff] %v643
          %646 = vst [vmem:[#allocation3 + $0x10] sm:$0xff] %v643
          %647 = vst [vmem:[#allocation3 + $0x18] sm:$0xff] %v643
          %648 = vst [vmem:[#allocation3 + $0x20] sm:$0xff] %v643
          %649 = vst [vmem:[#allocation3 + $0x28] sm:$0xff] %v643
          %650 = vst [vmem:[#allocation3 + $0x30] sm:$0xff] %v643
          %651 = vst [vmem:[#allocation3 + $0x38] sm:$0xff] %v643
          %652 = vst [vmem:[#allocation3 + $0x40] sm:$0xff] %v643
          %653 = vst [vmem:[#allocation3 + $0x48] sm:$0xff] %v643
          %654 = vst [vmem:[#allocation3 + $0x50] sm:$0xff] %v643
          %655 = vst [vmem:[#allocation3 + $0x58] sm:$0xff] %v643
          %656 = vst [vmem:[#allocation3 + $0x60] sm:$0xff] %v643
          %657 = vst [vmem:[#allocation3 + $0x68] sm:$0xff] %v643
          %658 = vst [vmem:[#allocation3 + $0x70] sm:$0xff] %v643
          %659 = vst [vmem:[#allocation3 + $0x78] sm:$0xff] %v643
        $region64: #{tpu_custom_call.1} parent=47 // pred_fallthru
          _
        %v660 = vld [vmem:[#allocation2] sm:$0xff]
        %v661 = vld [vmem:[#allocation2 + $0x8] sm:$0xff]
        %v662 = vld [vmem:[#allocation2 + $0x10] sm:$0xff]
        %v663 = vld [vmem:[#allocation2 + $0x18] sm:$0xff]
        %v664 = vld [vmem:[#allocation2 + $0x20] sm:$0xff]
        %v665 = vld [vmem:[#allocation2 + $0x28] sm:$0xff]
        %v666 = vld [vmem:[#allocation2 + $0x30] sm:$0xff]
        %v667 = vld [vmem:[#allocation2 + $0x38] sm:$0xff]
        %v668 = vld [vmem:[#allocation7] sm:$0xff]
        %v669 = vld [vmem:[#allocation7 + $0x8] sm:$0xff]
        %v670 = vld [vmem:[#allocation7 + $0x10] sm:$0xff]
        %v671 = vld [vmem:[#allocation7 + $0x18] sm:$0xff]
        %v672 = vld [vmem:[#allocation7 + $0x20] sm:$0xff]
        %v673 = vld [vmem:[#allocation7 + $0x28] sm:$0xff]
        %v674 = vld [vmem:[#allocation7 + $0x30] sm:$0xff]
        %v675 = vld [vmem:[#allocation7 + $0x38] sm:$0xff]
        %v676 = vld [vmem:[#allocation7 + $0x40] sm:$0xff]
        %v677 = vld [vmem:[#allocation7 + $0x48] sm:$0xff]
        %v678 = vld [vmem:[#allocation7 + $0x50] sm:$0xff]
        %v679 = vld [vmem:[#allocation7 + $0x58] sm:$0xff]
        %v680 = vld [vmem:[#allocation7 + $0x60] sm:$0xff]
        %v681 = vld [vmem:[#allocation7 + $0x68] sm:$0xff]
        %v682 = vld [vmem:[#allocation7 + $0x70] sm:$0xff]
        %v683 = vld [vmem:[#allocation7 + $0x78] sm:$0xff]
        %v684 = vld [vmem:[#allocation7 + $0x80] sm:$0xff]
        %v685 = vld [vmem:[#allocation7 + $0x88] sm:$0xff]
        %v686 = vld [vmem:[#allocation7 + $0x90] sm:$0xff]
        %v687 = vld [vmem:[#allocation7 + $0x98] sm:$0xff]
        %v688 = vld [vmem:[#allocation7 + $0xa0] sm:$0xff]
        %v689 = vld [vmem:[#allocation7 + $0xa8] sm:$0xff]
        %v690 = vld [vmem:[#allocation7 + $0xb0] sm:$0xff]
        %v691 = vld [vmem:[#allocation7 + $0xb8] sm:$0xff]
        %v692 = vld [vmem:[#allocation7 + $0xc0] sm:$0xff]
        %v693 = vld [vmem:[#allocation7 + $0xc8] sm:$0xff]
        %v694 = vld [vmem:[#allocation7 + $0xd0] sm:$0xff]
        %v695 = vld [vmem:[#allocation7 + $0xd8] sm:$0xff]
        %v696 = vld [vmem:[#allocation7 + $0xe0] sm:$0xff]
        %v697 = vld [vmem:[#allocation7 + $0xe8] sm:$0xff]
        %v698 = vld [vmem:[#allocation7 + $0xf0] sm:$0xff]
        %v699 = vld [vmem:[#allocation7 + $0xf8] sm:$0xff]
        %v700 = vld [vmem:[%s372] sm:$0xf]
        %v702 = vlaneseq
        %v703 = vshrl.u32 %v702, 7
        %v704 = vsub.s32 0, %v703
        %v705 = vrot.slane %v700, %v704
        %v706 = vlaneseq
        %v707 = vshrl.u32 %v706, 7
        %v708 = vsub.s32 1, %v707
        %v709 = vrot.slane %v700, %v708
        %v710 = vlaneseq
        %v711 = vshrl.u32 %v710, 7
        %v712 = vsub.s32 2, %v711
        %v713 = vrot.slane %v700, %v712
        %v714 = vlaneseq
        %v715 = vshrl.u32 %v714, 7
        %v716 = vsub.s32 3, %v715
        %v717 = vrot.slane %v700, %v716
        %v754 = vunpack.c.l.b16 %v668
        %v755 = vunpack.c.h.b16 %v668
        %v756 = vunpack.c.l.b16 %v669
        %v757 = vunpack.c.h.b16 %v669
        %v758 = vunpack.c.l.b16 %v670
        %v759 = vunpack.c.h.b16 %v670
        %v760 = vunpack.c.l.b16 %v671
        %v761 = vunpack.c.h.b16 %v671
        %v762 = vunpack.c.l.b16 %v672
        %v763 = vunpack.c.h.b16 %v672
        %v764 = vunpack.c.l.b16 %v673
        %v765 = vunpack.c.h.b16 %v673
        %v766 = vunpack.c.l.b16 %v674
        %v767 = vunpack.c.h.b16 %v674
        %v768 = vunpack.c.l.b16 %v675
        %v769 = vunpack.c.h.b16 %v675
        %v770 = vunpack.c.l.b16 %v676
        %v771 = vunpack.c.h.b16 %v676
        %v772 = vunpack.c.l.b16 %v677
        %v773 = vunpack.c.h.b16 %v677
        %v774 = vunpack.c.l.b16 %v678
        %v775 = vunpack.c.h.b16 %v678
        %v776 = vunpack.c.l.b16 %v679
        %v777 = vunpack.c.h.b16 %v679
        %v778 = vunpack.c.l.b16 %v680
        %v779 = vunpack.c.h.b16 %v680
        %v780 = vunpack.c.l.b16 %v681
        %v781 = vunpack.c.h.b16 %v681
        %v782 = vunpack.c.l.b16 %v682
        %v783 = vunpack.c.h.b16 %v682
        %v784 = vunpack.c.l.b16 %v683
        %v785 = vunpack.c.h.b16 %v683
        %v786 = vunpack.c.l.b16 %v684
        %v787 = vunpack.c.h.b16 %v684
        %v788 = vunpack.c.l.b16 %v685
        %v789 = vunpack.c.h.b16 %v685
        %v790 = vunpack.c.l.b16 %v686
        %v791 = vunpack.c.h.b16 %v686
        %v792 = vunpack.c.l.b16 %v687
        %v793 = vunpack.c.h.b16 %v687
        %v794 = vunpack.c.l.b16 %v688
        %v795 = vunpack.c.h.b16 %v688
        %v796 = vunpack.c.l.b16 %v689
        %v797 = vunpack.c.h.b16 %v689
        %v798 = vunpack.c.l.b16 %v690
        %v799 = vunpack.c.h.b16 %v690
        %v800 = vunpack.c.l.b16 %v691
        %v801 = vunpack.c.h.b16 %v691
        %v802 = vunpack.c.l.b16 %v692
        %v803 = vunpack.c.h.b16 %v692
        %v804 = vunpack.c.l.b16 %v693
        %v805 = vunpack.c.h.b16 %v693
        %v806 = vunpack.c.l.b16 %v694
        %v807 = vunpack.c.h.b16 %v694
        %v808 = vunpack.c.l.b16 %v695
        %v809 = vunpack.c.h.b16 %v695
        %v810 = vunpack.c.l.b16 %v696
        %v811 = vunpack.c.h.b16 %v696
        %v812 = vunpack.c.l.b16 %v697
        %v813 = vunpack.c.h.b16 %v697
        %v814 = vunpack.c.l.b16 %v698
        %v815 = vunpack.c.h.b16 %v698
        %v816 = vunpack.c.l.b16 %v699
        %v817 = vunpack.c.h.b16 %v699
        %v818 = vpack.c.b16 %v758, %v754
        %v819 = vpack.c.b16 %v759, %v755
        %v820 = vpack.c.b16 %v760, %v756
        %v821 = vpack.c.b16 %v761, %v757
        %v822 = vpack.c.b16 %v766, %v762
        %v823 = vpack.c.b16 %v767, %v763
        %v824 = vpack.c.b16 %v768, %v764
        %v825 = vpack.c.b16 %v769, %v765
        %v826 = vpack.c.b16 %v774, %v770
        %v827 = vpack.c.b16 %v775, %v771
        %v828 = vpack.c.b16 %v776, %v772
        %v829 = vpack.c.b16 %v777, %v773
        %v830 = vpack.c.b16 %v782, %v778
        %v831 = vpack.c.b16 %v783, %v779
        %v832 = vpack.c.b16 %v784, %v780
        %v833 = vpack.c.b16 %v785, %v781
        %v834 = vpack.c.b16 %v790, %v786
        %v835 = vpack.c.b16 %v791, %v787
        %v836 = vpack.c.b16 %v792, %v788
        %v837 = vpack.c.b16 %v793, %v789
        %v838 = vpack.c.b16 %v798, %v794
        %v839 = vpack.c.b16 %v799, %v795
        %v840 = vpack.c.b16 %v800, %v796
        %v841 = vpack.c.b16 %v801, %v797
        %v842 = vpack.c.b16 %v806, %v802
        %v843 = vpack.c.b16 %v807, %v803
        %v844 = vpack.c.b16 %v808, %v804
        %v845 = vpack.c.b16 %v809, %v805
        %v846 = vpack.c.b16 %v814, %v810
        %v847 = vpack.c.b16 %v815, %v811
        %v848 = vpack.c.b16 %v816, %v812
        %v849 = vpack.c.b16 %v817, %v813
        %882 = vmatprep.subr.bf16.mxu0 %v819
        %883 = vmatpush1.bf16.msra.mxu0 %v818
        %884 = vmatprep.subr.bf16.mxu0 %v823
        %885 = vmatpush1.bf16.msra.mxu0 %v822
        %886 = vmatprep.subr.bf16.mxu0 %v827
        %887 = vmatpush1.bf16.msra.mxu0 %v826
        %888 = vmatprep.subr.bf16.mxu0 %v831
        %889 = vmatpush1.bf16.msra.mxu0 %v830
        %890 = vmatprep.subr.bf16.mxu0 %v835
        %891 = vmatpush1.bf16.msra.mxu0 %v834
        %892 = vmatprep.subr.bf16.mxu0 %v839
        %893 = vmatpush1.bf16.msra.mxu0 %v838
        %894 = vmatprep.subr.bf16.mxu0 %v843
        %895 = vmatpush1.bf16.msra.mxu0 %v842
        %896 = vmatprep.subr.bf16.mxu0 %v847
        %897 = vmatpush1.bf16.msra.mxu0 %v846
        %898 = vmatprep.subr.bf16.mxu0 0
        %899 = vmatpush1.bf16.msra.mxu0 0
        %900 = vmatprep.subr.bf16.mxu0 0
        %901 = vmatpush1.bf16.msra.mxu0 0
        %902 = vmatprep.subr.bf16.mxu0 0
        %903 = vmatpush1.bf16.msra.mxu0 0
        %904 = vmatprep.subr.bf16.mxu0 0
        %905 = vmatpush1.bf16.msra.mxu0 0
        %906 = vmatprep.subr.bf16.mxu0 0
        %907 = vmatpush1.bf16.msra.mxu0 0
        %908 = vmatprep.subr.bf16.mxu0 0
        %909 = vmatpush1.bf16.msra.mxu0 0
        %910 = vmatprep.subr.bf16.mxu0 0
        %911 = vmatpush1.bf16.msra.mxu0 0
        %912 = vmatprep.subr.bf16.mxu0 0
        %913 = vmatpush1.bf16.msra.mxu0 0
        %914 = vmatprep.mubr.bf16.mxu0 0
        %915 = vmatmul.mubr.bf16.gmra.mrb[0].mxu0 %v660
        %v916 = vpop.f32.mrb[0].mxu0
        %v917 = vadd.f32 %v705, %v916
        %v918 = vpop.f32.mrb[0].mxu0
        %v919 = vadd.f32 %v709, %v918
        %v920 = vpop.f32.mrb[0].mxu0
        %v921 = vadd.f32 %v705, %v920
        %v922 = vpop.f32.mrb[0].mxu0
        %v923 = vadd.f32 %v709, %v922
        %924 = vmatprep.mubr.bf16.mxu0 0
        %925 = vmatmul.mubr.bf16.gmra.mrb[0].mxu0 %v661
        %v926 = vpop.f32.mrb[0].mxu0
        %v927 = vadd.f32 %v705, %v926
        %v928 = vpop.f32.mrb[0].mxu0
        %v929 = vadd.f32 %v709, %v928
        %v930 = vpop.f32.mrb[0].mxu0
        %v931 = vadd.f32 %v705, %v930
        %v932 = vpop.f32.mrb[0].mxu0
        %v933 = vadd.f32 %v709, %v932
        %934 = vmatprep.mubr.bf16.mxu0 0
        %935 = vmatmul.mubr.bf16.gmra.mrb[0].mxu0 %v662
        %v936 = vpop.f32.mrb[0].mxu0
        %v937 = vadd.f32 %v705, %v936
        %v938 = vpop.f32.mrb[0].mxu0
        %v939 = vadd.f32 %v709, %v938
        %v940 = vpop.f32.mrb[0].mxu0
        %v941 = vadd.f32 %v705, %v940
        %v942 = vpop.f32.mrb[0].mxu0
        %v943 = vadd.f32 %v709, %v942
        %944 = vmatprep.mubr.bf16.mxu0 0
        %945 = vmatmul.mubr.bf16.gmra.mrb[0].mxu0 %v663
        %v946 = vpop.f32.mrb[0].mxu0
        %v947 = vadd.f32 %v705, %v946
        %v948 = vpop.f32.mrb[0].mxu0
        %v949 = vadd.f32 %v709, %v948
        %v950 = vpop.f32.mrb[0].mxu0
        %v951 = vadd.f32 %v705, %v950
        %v952 = vpop.f32.mrb[0].mxu0
        %v953 = vadd.f32 %v709, %v952
        %954 = vmatprep.mubr.bf16.mxu0 0
        %955 = vmatmul.mubr.bf16.gmra.mrb[0].mxu0 %v664
        %v956 = vpop.f32.mrb[0].mxu0
        %v957 = vadd.f32 %v705, %v956
        %v958 = vpop.f32.mrb[0].mxu0
        %v959 = vadd.f32 %v709, %v958
        %v960 = vpop.f32.mrb[0].mxu0
        %v961 = vadd.f32 %v705, %v960
        %v962 = vpop.f32.mrb[0].mxu0
        %v963 = vadd.f32 %v709, %v962
        %964 = vmatprep.mubr.bf16.mxu0 0
        %965 = vmatmul.mubr.bf16.gmra.mrb[0].mxu0 %v665
        %v966 = vpop.f32.mrb[0].mxu0
        %v967 = vadd.f32 %v705, %v966
        %v968 = vpop.f32.mrb[0].mxu0
        %v969 = vadd.f32 %v709, %v968
        %v970 = vpop.f32.mrb[0].mxu0
        %v971 = vadd.f32 %v705, %v970
        %v972 = vpop.f32.mrb[0].mxu0
        %v973 = vadd.f32 %v709, %v972
        %974 = vmatprep.mubr.bf16.mxu0 0
        %975 = vmatmul.mubr.bf16.gmra.mrb[0].mxu0 %v666
        %v976 = vpop.f32.mrb[0].mxu0
        %v977 = vadd.f32 %v705, %v976
        %v978 = vpop.f32.mrb[0].mxu0
        %v979 = vadd.f32 %v709, %v978
        %v980 = vpop.f32.mrb[0].mxu0
        %v981 = vadd.f32 %v705, %v980
        %v982 = vpop.f32.mrb[0].mxu0
        %v983 = vadd.f32 %v709, %v982
        %984 = vmatprep.mubr.bf16.mxu0 0
        %985 = vmatmul.mubr.bf16.gmra.mrb[0].mxu0 %v667
        %v986 = vpop.f32.mrb[0].mxu0
        %v987 = vadd.f32 %v705, %v986
        %v988 = vpop.f32.mrb[0].mxu0
        %v989 = vadd.f32 %v709, %v988
        %v990 = vpop.f32.mrb[0].mxu0
        %v991 = vadd.f32 %v705, %v990
        %v992 = vpop.f32.mrb[0].mxu0
        %v993 = vadd.f32 %v709, %v992
        %994 = vdwg.mxu0
        %995 = vmatprep.subr.bf16.mxu0 %v821
        %996 = vmatpush1.bf16.msra.mxu0 %v820
        %997 = vmatprep.subr.bf16.mxu0 %v825
        %998 = vmatpush1.bf16.msra.mxu0 %v824
        %999 = vmatprep.subr.bf16.mxu0 %v829
        %1000 = vmatpush1.bf16.msra.mxu0 %v828
        %1001 = vmatprep.subr.bf16.mxu0 %v833
        %1002 = vmatpush1.bf16.msra.mxu0 %v832
        %1003 = vmatprep.subr.bf16.mxu0 %v837
        %1004 = vmatpush1.bf16.msra.mxu0 %v836
        %1005 = vmatprep.subr.bf16.mxu0 %v841
        %1006 = vmatpush1.bf16.msra.mxu0 %v840
        %1007 = vmatprep.subr.bf16.mxu0 %v845
        %1008 = vmatpush1.bf16.msra.mxu0 %v844
        %1009 = vmatprep.subr.bf16.mxu0 %v849
        %1010 = vmatpush1.bf16.msra.mxu0 %v848
        %1011 = vmatprep.subr.bf16.mxu0 0
        %1012 = vmatpush1.bf16.msra.mxu0 0
        %1013 = vmatprep.subr.bf16.mxu0 0
        %1014 = vmatpush1.bf16.msra.mxu0 0
        %1015 = vmatprep.subr.bf16.mxu0 0
        %1016 = vmatpush1.bf16.msra.mxu0 0
        %1017 = vmatprep.subr.bf16.mxu0 0
        %1018 = vmatpush1.bf16.msra.mxu0 0
        %1019 = vmatprep.subr.bf16.mxu0 0
        %1020 = vmatpush1.bf16.msra.mxu0 0
        %1021 = vmatprep.subr.bf16.mxu0 0
        %1022 = vmatpush1.bf16.msra.mxu0 0
        %1023 = vmatprep.subr.bf16.mxu0 0
        %1024 = vmatpush1.bf16.msra.mxu0 0
        %1025 = vmatprep.subr.bf16.mxu0 0
        %1026 = vmatpush1.bf16.msra.mxu0 0
        %1027 = vmatprep.mubr.bf16.mxu0 0
        %1028 = vmatmul.mubr.bf16.gmra.mrb[0].mxu0 %v660
        %v1029 = vpop.f32.mrb[0].mxu0
        %v1030 = vadd.f32 %v713, %v1029
        %v1031 = vpop.f32.mrb[0].mxu0
        %v1032 = vadd.f32 %v717, %v1031
        %v1033 = vpop.f32.mrb[0].mxu0
        %v1034 = vadd.f32 %v713, %v1033
        %v1035 = vpop.f32.mrb[0].mxu0
        %v1036 = vadd.f32 %v717, %v1035
        %1037 = vmatprep.mubr.bf16.mxu0 0
        %1038 = vmatmul.mubr.bf16.gmra.mrb[0].mxu0 %v661
        %v1039 = vpop.f32.mrb[0].mxu0
        %v1040 = vadd.f32 %v713, %v1039
        %v1041 = vpop.f32.mrb[0].mxu0
        %v1042 = vadd.f32 %v717, %v1041
        %v1043 = vpop.f32.mrb[0].mxu0
        %v1044 = vadd.f32 %v713, %v1043
        %v1045 = vpop.f32.mrb[0].mxu0
        %v1046 = vadd.f32 %v717, %v1045
        %1047 = vmatprep.mubr.bf16.mxu0 0
        %1048 = vmatmul.mubr.bf16.gmra.mrb[0].mxu0 %v662
        %v1049 = vpop.f32.mrb[0].mxu0
        %v1050 = vadd.f32 %v713, %v1049
        %v1051 = vpop.f32.mrb[0].mxu0
        %v1052 = vadd.f32 %v717, %v1051
        %v1053 = vpop.f32.mrb[0].mxu0
        %v1054 = vadd.f32 %v713, %v1053
        %v1055 = vpop.f32.mrb[0].mxu0
        %v1056 = vadd.f32 %v717, %v1055
        %1057 = vmatprep.mubr.bf16.mxu0 0
        %1058 = vmatmul.mubr.bf16.gmra.mrb[0].mxu0 %v663
        %v1059 = vpop.f32.mrb[0].mxu0
        %v1060 = vadd.f32 %v713, %v1059
        %v1061 = vpop.f32.mrb[0].mxu0
        %v1062 = vadd.f32 %v717, %v1061
        %v1063 = vpop.f32.mrb[0].mxu0
        %v1064 = vadd.f32 %v713, %v1063
        %v1065 = vpop.f32.mrb[0].mxu0
        %v1066 = vadd.f32 %v717, %v1065
        %1067 = vmatprep.mubr.bf16.mxu0 0
        %1068 = vmatmul.mubr.bf16.gmra.mrb[0].mxu0 %v664
        %v1069 = vpop.f32.mrb[0].mxu0
        %v1070 = vadd.f32 %v713, %v1069
        %v1071 = vpop.f32.mrb[0].mxu0
        %v1072 = vadd.f32 %v717, %v1071
        %v1073 = vpop.f32.mrb[0].mxu0
        %v1074 = vadd.f32 %v713, %v1073
        %v1075 = vpop.f32.mrb[0].mxu0
        %v1076 = vadd.f32 %v717, %v1075
        %1077 = vmatprep.mubr.bf16.mxu0 0
        %1078 = vmatmul.mubr.bf16.gmra.mrb[0].mxu0 %v665
        %v1079 = vpop.f32.mrb[0].mxu0
        %v1080 = vadd.f32 %v713, %v1079
        %v1081 = vpop.f32.mrb[0].mxu0
        %v1082 = vadd.f32 %v717, %v1081
        %v1083 = vpop.f32.mrb[0].mxu0
        %v1084 = vadd.f32 %v713, %v1083
        %v1085 = vpop.f32.mrb[0].mxu0
        %v1086 = vadd.f32 %v717, %v1085
        %1087 = vmatprep.mubr.bf16.mxu0 0
        %1088 = vmatmul.mubr.bf16.gmra.mrb[0].mxu0 %v666
        %v1089 = vpop.f32.mrb[0].mxu0
        %v1090 = vadd.f32 %v713, %v1089
        %v1091 = vpop.f32.mrb[0].mxu0
        %v1092 = vadd.f32 %v717, %v1091
        %v1093 = vpop.f32.mrb[0].mxu0
        %v1094 = vadd.f32 %v713, %v1093
        %v1095 = vpop.f32.mrb[0].mxu0
        %v1096 = vadd.f32 %v717, %v1095
        %1097 = vmatprep.mubr.bf16.mxu0 0
        %1098 = vmatmul.mubr.bf16.gmra.mrb[0].mxu0 %v667
        %v1099 = vpop.f32.mrb[0].mxu0
        %v1100 = vadd.f32 %v713, %v1099
        %v1101 = vpop.f32.mrb[0].mxu0
        %v1102 = vadd.f32 %v717, %v1101
        %v1103 = vpop.f32.mrb[0].mxu0
        %v1104 = vadd.f32 %v713, %v1103
        %v1105 = vpop.f32.mrb[0].mxu0
        %v1106 = vadd.f32 %v717, %v1105
        %1107 = vdwg.mxu0
        %v1108 = vmul.f32 %v917, 0.5
        %v1109 = vmul.f32 %v919, 0.5
        %v1110 = vmul.f32 %v1030, 0.5
        %v1111 = vmul.f32 %v1032, 0.5
        %v1112 = vmul.f32 %v921, 0.5
        %v1113 = vmul.f32 %v923, 0.5
        %v1114 = vmul.f32 %v1034, 0.5
        %v1115 = vmul.f32 %v1036, 0.5
        %v1116 = vmul.f32 %v927, 0.5
        %v1117 = vmul.f32 %v929, 0.5
        %v1118 = vmul.f32 %v1040, 0.5
        %v1119 = vmul.f32 %v1042, 0.5
        %v1120 = vmul.f32 %v931, 0.5
        %v1121 = vmul.f32 %v933, 0.5
        %v1122 = vmul.f32 %v1044, 0.5
        %v1123 = vmul.f32 %v1046, 0.5
        %v1124 = vmul.f32 %v937, 0.5
        %v1125 = vmul.f32 %v939, 0.5
        %v1126 = vmul.f32 %v1050, 0.5
        %v1127 = vmul.f32 %v1052, 0.5
        %v1128 = vmul.f32 %v941, 0.5
        %v1129 = vmul.f32 %v943, 0.5
        %v1130 = vmul.f32 %v1054, 0.5
        %v1131 = vmul.f32 %v1056, 0.5
        %v1132 = vmul.f32 %v947, 0.5
        %v1133 = vmul.f32 %v949, 0.5
        %v1134 = vmul.f32 %v1060, 0.5
        %v1135 = vmul.f32 %v1062, 0.5
        %v1136 = vmul.f32 %v951, 0.5
        %v1137 = vmul.f32 %v953, 0.5
        %v1138 = vmul.f32 %v1064, 0.5
        %v1139 = vmul.f32 %v1066, 0.5
        %v1140 = vmul.f32 %v957, 0.5
        %v1141 = vmul.f32 %v959, 0.5
        %v1142 = vmul.f32 %v1070, 0.5
        %v1143 = vmul.f32 %v1072, 0.5
        %v1144 = vmul.f32 %v961, 0.5
        %v1145 = vmul.f32 %v963, 0.5
        %v1146 = vmul.f32 %v1074, 0.5
        %v1147 = vmul.f32 %v1076, 0.5
        %v1148 = vmul.f32 %v967, 0.5
        %v1149 = vmul.f32 %v969, 0.5
        %v1150 = vmul.f32 %v1080, 0.5
        %v1151 = vmul.f32 %v1082, 0.5
        %v1152 = vmul.f32 %v971, 0.5
        %v1153 = vmul.f32 %v973, 0.5
        %v1154 = vmul.f32 %v1084, 0.5
        %v1155 = vmul.f32 %v1086, 0.5
        %v1156 = vmul.f32 %v977, 0.5
        %v1157 = vmul.f32 %v979, 0.5
        %v1158 = vmul.f32 %v1090, 0.5
        %v1159 = vmul.f32 %v1092, 0.5
        %v1160 = vmul.f32 %v981, 0.5
        %v1161 = vmul.f32 %v983, 0.5
        %v1162 = vmul.f32 %v1094, 0.5
        %v1163 = vmul.f32 %v1096, 0.5
        %v1164 = vmul.f32 %v987, 0.5
        %v1165 = vmul.f32 %v989, 0.5
        %v1166 = vmul.f32 %v1100, 0.5
        %v1167 = vmul.f32 %v1102, 0.5
        %v1168 = vmul.f32 %v991, 0.5
        %v1169 = vmul.f32 %v993, 0.5
        %v1170 = vmul.f32 %v1104, 0.5
        %v1171 = vmul.f32 %v1106, 0.5
        %v1172 = vmul.f32 %v917, 0.70710677
        %v1173 = vmul.f32 %v919, 0.70710677
        %v1174 = vmul.f32 %v1030, 0.70710677
        %v1175 = vmul.f32 %v1032, 0.70710677
        %v1176 = vmul.f32 %v921, 0.70710677
        %v1177 = vmul.f32 %v923, 0.70710677
        %v1178 = vmul.f32 %v1034, 0.70710677
        %v1179 = vmul.f32 %v1036, 0.70710677
        %v1180 = vmul.f32 %v927, 0.70710677
        %v1181 = vmul.f32 %v929, 0.70710677
        %v1182 = vmul.f32 %v1040, 0.70710677
        %v1183 = vmul.f32 %v1042, 0.70710677
        %v1184 = vmul.f32 %v931, 0.70710677
        %v1185 = vmul.f32 %v933, 0.70710677
        %v1186 = vmul.f32 %v1044, 0.70710677
        %v1187 = vmul.f32 %v1046, 0.70710677
        %v1188 = vmul.f32 %v937, 0.70710677
        %v1189 = vmul.f32 %v939, 0.70710677
        %v1190 = vmul.f32 %v1050, 0.70710677
        %v1191 = vmul.f32 %v1052, 0.70710677
        %v1192 = vmul.f32 %v941, 0.70710677
        %v1193 = vmul.f32 %v943, 0.70710677
        %v1194 = vmul.f32 %v1054, 0.70710677
        %v1195 = vmul.f32 %v1056, 0.70710677
        %v1196 = vmul.f32 %v947, 0.70710677
        %v1197 = vmul.f32 %v949, 0.70710677
        %v1198 = vmul.f32 %v1060, 0.70710677
        %v1199 = vmul.f32 %v1062, 0.70710677
        %v1200 = vmul.f32 %v951, 0.70710677
        %v1201 = vmul.f32 %v953, 0.70710677
        %v1202 = vmul.f32 %v1064, 0.70710677
        %v1203 = vmul.f32 %v1066, 0.70710677
        %v1204 = vmul.f32 %v957, 0.70710677
        %v1205 = vmul.f32 %v959, 0.70710677
        %v1206 = vmul.f32 %v1070, 0.70710677
        %v1207 = vmul.f32 %v1072, 0.70710677
        %v1208 = vmul.f32 %v961, 0.70710677
        %v1209 = vmul.f32 %v963, 0.70710677
        %v1210 = vmul.f32 %v1074, 0.70710677
        %v1211 = vmul.f32 %v1076, 0.70710677
        %v1212 = vmul.f32 %v967, 0.70710677
        %v1213 = vmul.f32 %v969, 0.70710677
        %v1214 = vmul.f32 %v1080, 0.70710677
        %v1215 = vmul.f32 %v1082, 0.70710677
        %v1216 = vmul.f32 %v971, 0.70710677
        %v1217 = vmul.f32 %v973, 0.70710677
        %v1218 = vmul.f32 %v1084, 0.70710677
        %v1219 = vmul.f32 %v1086, 0.70710677
        %v1220 = vmul.f32 %v977, 0.70710677
        %v1221 = vmul.f32 %v979, 0.70710677
        %v1222 = vmul.f32 %v1090, 0.70710677
        %v1223 = vmul.f32 %v1092, 0.70710677
        %v1224 = vmul.f32 %v981, 0.70710677
        %v1225 = vmul.f32 %v983, 0.70710677
        %v1226 = vmul.f32 %v1094, 0.70710677
        %v1227 = vmul.f32 %v1096, 0.70710677
        %v1228 = vmul.f32 %v987, 0.70710677
        %v1229 = vmul.f32 %v989, 0.70710677
        %v1230 = vmul.f32 %v1100, 0.70710677
        %v1231 = vmul.f32 %v1102, 0.70710677
        %v1232 = vmul.f32 %v991, 0.70710677
        %v1233 = vmul.f32 %v993, 0.70710677
        %v1234 = vmul.f32 %v1104, 0.70710677
        %v1235 = vmul.f32 %v1106, 0.70710677
        %v1236 = verf.f32.pop %v1172
        %v1237 = verf.f32.pop %v1173
        %v1238 = verf.f32.pop %v1174
        %v1239 = verf.f32.pop %v1175
        %v1240 = verf.f32.pop %v1176
        %v1241 = verf.f32.pop %v1177
        %v1242 = verf.f32.pop %v1178
        %v1243 = verf.f32.pop %v1179
        %v1244 = verf.f32.pop %v1180
        %v1245 = verf.f32.pop %v1181
        %v1246 = verf.f32.pop %v1182
        %v1247 = verf.f32.pop %v1183
        %v1248 = verf.f32.pop %v1184
        %v1249 = verf.f32.pop %v1185
        %v1250 = verf.f32.pop %v1186
        %v1251 = verf.f32.pop %v1187
        %v1252 = verf.f32.pop %v1188
        %v1253 = verf.f32.pop %v1189
        %v1254 = verf.f32.pop %v1190
        %v1255 = verf.f32.pop %v1191
        %v1256 = verf.f32.pop %v1192
        %v1257 = verf.f32.pop %v1193
        %v1258 = verf.f32.pop %v1194
        %v1259 = verf.f32.pop %v1195
        %v1260 = verf.f32.pop %v1196
        %v1261 = verf.f32.pop %v1197
        %v1262 = verf.f32.pop %v1198
        %v1263 = verf.f32.pop %v1199
        %v1264 = verf.f32.pop %v1200
        %v1265 = verf.f32.pop %v1201
        %v1266 = verf.f32.pop %v1202
        %v1267 = verf.f32.pop %v1203
        %v1268 = verf.f32.pop %v1204
        %v1269 = verf.f32.pop %v1205
        %v1270 = verf.f32.pop %v1206
        %v1271 = verf.f32.pop %v1207
        %v1272 = verf.f32.pop %v1208
        %v1273 = verf.f32.pop %v1209
        %v1274 = verf.f32.pop %v1210
        %v1275 = verf.f32.pop %v1211
        %v1276 = verf.f32.pop %v1212
        %v1277 = verf.f32.pop %v1213
        %v1278 = verf.f32.pop %v1214
        %v1279 = verf.f32.pop %v1215
        %v1280 = verf.f32.pop %v1216
        %v1281 = verf.f32.pop %v1217
        %v1282 = verf.f32.pop %v1218
        %v1283 = verf.f32.pop %v1219
        %v1284 = verf.f32.pop %v1220
        %v1285 = verf.f32.pop %v1221
        %v1286 = verf.f32.pop %v1222
        %v1287 = verf.f32.pop %v1223
        %v1288 = verf.f32.pop %v1224
        %v1289 = verf.f32.pop %v1225
        %v1290 = verf.f32.pop %v1226
        %v1291 = verf.f32.pop %v1227
        %v1292 = verf.f32.pop %v1228
        %v1293 = verf.f32.pop %v1229
        %v1294 = verf.f32.pop %v1230
        %v1295 = verf.f32.pop %v1231
        %v1296 = verf.f32.pop %v1232
        %v1297 = verf.f32.pop %v1233
        %v1298 = verf.f32.pop %v1234
        %v1299 = verf.f32.pop %v1235
        %v1300 = vadd.f32 %v1236, 1.0
        %v1301 = vadd.f32 %v1237, 1.0
        %v1302 = vadd.f32 %v1238, 1.0
        %v1303 = vadd.f32 %v1239, 1.0
        %v1304 = vadd.f32 %v1240, 1.0
        %v1305 = vadd.f32 %v1241, 1.0
        %v1306 = vadd.f32 %v1242, 1.0
        %v1307 = vadd.f32 %v1243, 1.0
        %v1308 = vadd.f32 %v1244, 1.0
        %v1309 = vadd.f32 %v1245, 1.0
        %v1310 = vadd.f32 %v1246, 1.0
        %v1311 = vadd.f32 %v1247, 1.0
        %v1312 = vadd.f32 %v1248, 1.0
        %v1313 = vadd.f32 %v1249, 1.0
        %v1314 = vadd.f32 %v1250, 1.0
        %v1315 = vadd.f32 %v1251, 1.0
        %v1316 = vadd.f32 %v1252, 1.0
        %v1317 = vadd.f32 %v1253, 1.0
        %v1318 = vadd.f32 %v1254, 1.0
        %v1319 = vadd.f32 %v1255, 1.0
        %v1320 = vadd.f32 %v1256, 1.0
        %v1321 = vadd.f32 %v1257, 1.0
        %v1322 = vadd.f32 %v1258, 1.0
        %v1323 = vadd.f32 %v1259, 1.0
        %v1324 = vadd.f32 %v1260, 1.0
        %v1325 = vadd.f32 %v1261, 1.0
        %v1326 = vadd.f32 %v1262, 1.0
        %v1327 = vadd.f32 %v1263, 1.0
        %v1328 = vadd.f32 %v1264, 1.0
        %v1329 = vadd.f32 %v1265, 1.0
        %v1330 = vadd.f32 %v1266, 1.0
        %v1331 = vadd.f32 %v1267, 1.0
        %v1332 = vadd.f32 %v1268, 1.0
        %v1333 = vadd.f32 %v1269, 1.0
        %v1334 = vadd.f32 %v1270, 1.0
        %v1335 = vadd.f32 %v1271, 1.0
        %v1336 = vadd.f32 %v1272, 1.0
        %v1337 = vadd.f32 %v1273, 1.0
        %v1338 = vadd.f32 %v1274, 1.0
        %v1339 = vadd.f32 %v1275, 1.0
        %v1340 = vadd.f32 %v1276, 1.0
        %v1341 = vadd.f32 %v1277, 1.0
        %v1342 = vadd.f32 %v1278, 1.0
        %v1343 = vadd.f32 %v1279, 1.0
        %v1344 = vadd.f32 %v1280, 1.0
        %v1345 = vadd.f32 %v1281, 1.0
        %v1346 = vadd.f32 %v1282, 1.0
        %v1347 = vadd.f32 %v1283, 1.0
        %v1348 = vadd.f32 %v1284, 1.0
        %v1349 = vadd.f32 %v1285, 1.0
        %v1350 = vadd.f32 %v1286, 1.0
        %v1351 = vadd.f32 %v1287, 1.0
        %v1352 = vadd.f32 %v1288, 1.0
        %v1353 = vadd.f32 %v1289, 1.0
        %v1354 = vadd.f32 %v1290, 1.0
        %v1355 = vadd.f32 %v1291, 1.0
        %v1356 = vadd.f32 %v1292, 1.0
        %v1357 = vadd.f32 %v1293, 1.0
        %v1358 = vadd.f32 %v1294, 1.0
        %v1359 = vadd.f32 %v1295, 1.0
        %v1360 = vadd.f32 %v1296, 1.0
        %v1361 = vadd.f32 %v1297, 1.0
        %v1362 = vadd.f32 %v1298, 1.0
        %v1363 = vadd.f32 %v1299, 1.0
        %v1364 = vmul.f32 %v1108, %v1300
        %v1365 = vmul.f32 %v1109, %v1301
        %v1366 = vmul.f32 %v1110, %v1302
        %v1367 = vmul.f32 %v1111, %v1303
        %v1368 = vmul.f32 %v1112, %v1304
        %v1369 = vmul.f32 %v1113, %v1305
        %v1370 = vmul.f32 %v1114, %v1306
        %v1371 = vmul.f32 %v1115, %v1307
        %v1372 = vmul.f32 %v1116, %v1308
        %v1373 = vmul.f32 %v1117, %v1309
        %v1374 = vmul.f32 %v1118, %v1310
        %v1375 = vmul.f32 %v1119, %v1311
        %v1376 = vmul.f32 %v1120, %v1312
        %v1377 = vmul.f32 %v1121, %v1313
        %v1378 = vmul.f32 %v1122, %v1314
        %v1379 = vmul.f32 %v1123, %v1315
        %v1380 = vmul.f32 %v1124, %v1316
        %v1381 = vmul.f32 %v1125, %v1317
        %v1382 = vmul.f32 %v1126, %v1318
        %v1383 = vmul.f32 %v1127, %v1319
        %v1384 = vmul.f32 %v1128, %v1320
        %v1385 = vmul.f32 %v1129, %v1321
        %v1386 = vmul.f32 %v1130, %v1322
        %v1387 = vmul.f32 %v1131, %v1323
        %v1388 = vmul.f32 %v1132, %v1324
        %v1389 = vmul.f32 %v1133, %v1325
        %v1390 = vmul.f32 %v1134, %v1326
        %v1391 = vmul.f32 %v1135, %v1327
        %v1392 = vmul.f32 %v1136, %v1328
        %v1393 = vmul.f32 %v1137, %v1329
        %v1394 = vmul.f32 %v1138, %v1330
        %v1395 = vmul.f32 %v1139, %v1331
        %v1396 = vmul.f32 %v1140, %v1332
        %v1397 = vmul.f32 %v1141, %v1333
        %v1398 = vmul.f32 %v1142, %v1334
        %v1399 = vmul.f32 %v1143, %v1335
        %v1400 = vmul.f32 %v1144, %v1336
        %v1401 = vmul.f32 %v1145, %v1337
        %v1402 = vmul.f32 %v1146, %v1338
        %v1403 = vmul.f32 %v1147, %v1339
        %v1404 = vmul.f32 %v1148, %v1340
        %v1405 = vmul.f32 %v1149, %v1341
        %v1406 = vmul.f32 %v1150, %v1342
        %v1407 = vmul.f32 %v1151, %v1343
        %v1408 = vmul.f32 %v1152, %v1344
        %v1409 = vmul.f32 %v1153, %v1345
        %v1410 = vmul.f32 %v1154, %v1346
        %v1411 = vmul.f32 %v1155, %v1347
        %v1412 = vmul.f32 %v1156, %v1348
        %v1413 = vmul.f32 %v1157, %v1349
        %v1414 = vmul.f32 %v1158, %v1350
        %v1415 = vmul.f32 %v1159, %v1351
        %v1416 = vmul.f32 %v1160, %v1352
        %v1417 = vmul.f32 %v1161, %v1353
        %v1418 = vmul.f32 %v1162, %v1354
        %v1419 = vmul.f32 %v1163, %v1355
        %v1420 = vmul.f32 %v1164, %v1356
        %v1421 = vmul.f32 %v1165, %v1357
        %v1422 = vmul.f32 %v1166, %v1358
        %v1423 = vmul.f32 %v1167, %v1359
        %v1424 = vmul.f32 %v1168, %v1360
        %v1425 = vmul.f32 %v1169, %v1361
        %v1426 = vmul.f32 %v1170, %v1362
        %v1427 = vmul.f32 %v1171, %v1363
        %v1428 = vld [vmem:[#allocation3] sm:$0xff]
        %v1429 = vld [vmem:[#allocation3 + $0x8] sm:$0xff]
        %v1430 = vld [vmem:[#allocation3 + $0x10] sm:$0xff]
        %v1431 = vld [vmem:[#allocation3 + $0x18] sm:$0xff]
        %v1432 = vld [vmem:[#allocation3 + $0x20] sm:$0xff]
        %v1433 = vld [vmem:[#allocation3 + $0x28] sm:$0xff]
        %v1434 = vld [vmem:[#allocation3 + $0x30] sm:$0xff]
        %v1435 = vld [vmem:[#allocation3 + $0x38] sm:$0xff]
        %v1436 = vld [vmem:[#allocation3 + $0x40] sm:$0xff]
        %v1437 = vld [vmem:[#allocation3 + $0x48] sm:$0xff]
        %v1438 = vld [vmem:[#allocation3 + $0x50] sm:$0xff]
        %v1439 = vld [vmem:[#allocation3 + $0x58] sm:$0xff]
        %v1440 = vld [vmem:[#allocation3 + $0x60] sm:$0xff]
        %v1441 = vld [vmem:[#allocation3 + $0x68] sm:$0xff]
        %v1442 = vld [vmem:[#allocation3 + $0x70] sm:$0xff]
        %v1443 = vld [vmem:[#allocation3 + $0x78] sm:$0xff]
        %v1444 = vpack.c.bf16 %v1368, %v1364
        %v1445 = vpack.c.bf16 %v1369, %v1365
        %v1446 = vpack.c.bf16 %v1370, %v1366
        %v1447 = vpack.c.bf16 %v1371, %v1367
        %v1448 = vpack.c.bf16 %v1376, %v1372
        %v1449 = vpack.c.bf16 %v1377, %v1373
        %v1450 = vpack.c.bf16 %v1378, %v1374
        %v1451 = vpack.c.bf16 %v1379, %v1375
        %v1452 = vpack.c.bf16 %v1384, %v1380
        %v1453 = vpack.c.bf16 %v1385, %v1381
        %v1454 = vpack.c.bf16 %v1386, %v1382
        %v1455 = vpack.c.bf16 %v1387, %v1383
        %v1456 = vpack.c.bf16 %v1392, %v1388
        %v1457 = vpack.c.bf16 %v1393, %v1389
        %v1458 = vpack.c.bf16 %v1394, %v1390
        %v1459 = vpack.c.bf16 %v1395, %v1391
        %v1460 = vpack.c.bf16 %v1400, %v1396
        %v1461 = vpack.c.bf16 %v1401, %v1397
        %v1462 = vpack.c.bf16 %v1402, %v1398
        %v1463 = vpack.c.bf16 %v1403, %v1399
        %v1464 = vpack.c.bf16 %v1408, %v1404
        %v1465 = vpack.c.bf16 %v1409, %v1405
        %v1466 = vpack.c.bf16 %v1410, %v1406
        %v1467 = vpack.c.bf16 %v1411, %v1407
        %v1468 = vpack.c.bf16 %v1416, %v1412
        %v1469 = vpack.c.bf16 %v1417, %v1413
        %v1470 = vpack.c.bf16 %v1418, %v1414
        %v1471 = vpack.c.bf16 %v1419, %v1415
        %v1472 = vpack.c.bf16 %v1424, %v1420
        %v1473 = vpack.c.bf16 %v1425, %v1421
        %v1474 = vpack.c.bf16 %v1426, %v1422
        %v1475 = vpack.c.bf16 %v1427, %v1423
        %v1476 = vld [vmem:[#allocation9] sm:$0xf]
        %v1477 = vld [vmem:[#allocation9 + $0x4] sm:$0xf]
        %v1478 = vld [vmem:[#allocation9 + $0x8] sm:$0xf]
        %v1479 = vld [vmem:[#allocation9 + $0xc] sm:$0xf]
        %v1480 = vld [vmem:[#allocation9 + $0x10] sm:$0xf]
        %v1481 = vld [vmem:[#allocation9 + $0x14] sm:$0xf]
        %v1482 = vld [vmem:[#allocation9 + $0x18] sm:$0xf]
        %v1483 = vld [vmem:[#allocation9 + $0x1c] sm:$0xf]
        %v1484 = vld [vmem:[#allocation9 + $0x20] sm:$0xf]
        %v1485 = vld [vmem:[#allocation9 + $0x24] sm:$0xf]
        %v1486 = vld [vmem:[#allocation9 + $0x28] sm:$0xf]
        %v1487 = vld [vmem:[#allocation9 + $0x2c] sm:$0xf]
        %v1488 = vld [vmem:[#allocation9 + $0x30] sm:$0xf]
        %v1489 = vld [vmem:[#allocation9 + $0x34] sm:$0xf]
        %v1490 = vld [vmem:[#allocation9 + $0x38] sm:$0xf]
        %v1491 = vld [vmem:[#allocation9 + $0x3c] sm:$0xf]
        %v1492 = vld [vmem:[#allocation9 + $0x40] sm:$0xf]
        %v1493 = vld [vmem:[#allocation9 + $0x44] sm:$0xf]
        %v1494 = vld [vmem:[#allocation9 + $0x48] sm:$0xf]
        %v1495 = vld [vmem:[#allocation9 + $0x4c] sm:$0xf]
        %v1496 = vld [vmem:[#allocation9 + $0x50] sm:$0xf]
        %v1497 = vld [vmem:[#allocation9 + $0x54] sm:$0xf]
        %v1498 = vld [vmem:[#allocation9 + $0x58] sm:$0xf]
        %v1499 = vld [vmem:[#allocation9 + $0x5c] sm:$0xf]
        %v1500 = vld [vmem:[#allocation9 + $0x60] sm:$0xf]
        %v1501 = vld [vmem:[#allocation9 + $0x64] sm:$0xf]
        %v1502 = vld [vmem:[#allocation9 + $0x68] sm:$0xf]
        %v1503 = vld [vmem:[#allocation9 + $0x6c] sm:$0xf]
        %v1504 = vld [vmem:[#allocation9 + $0x70] sm:$0xf]
        %v1505 = vld [vmem:[#allocation9 + $0x74] sm:$0xf]
        %v1506 = vld [vmem:[#allocation9 + $0x78] sm:$0xf]
        %v1507 = vld [vmem:[#allocation9 + $0x7c] sm:$0xf]
        %v1508 = vld [vmem:[#allocation9 + $0x80] sm:$0xf]
        %v1509 = vld [vmem:[#allocation9 + $0x84] sm:$0xf]
        %v1510 = vld [vmem:[#allocation9 + $0x88] sm:$0xf]
        %v1511 = vld [vmem:[#allocation9 + $0x8c] sm:$0xf]
        %v1512 = vld [vmem:[#allocation9 + $0x90] sm:$0xf]
        %v1513 = vld [vmem:[#allocation9 + $0x94] sm:$0xf]
        %v1514 = vld [vmem:[#allocation9 + $0x98] sm:$0xf]
        %v1515 = vld [vmem:[#allocation9 + $0x9c] sm:$0xf]
        %v1516 = vld [vmem:[#allocation9 + $0xa0] sm:$0xf]
        %v1517 = vld [vmem:[#allocation9 + $0xa4] sm:$0xf]
        %v1518 = vld [vmem:[#allocation9 + $0xa8] sm:$0xf]
        %v1519 = vld [vmem:[#allocation9 + $0xac] sm:$0xf]
        %v1520 = vld [vmem:[#allocation9 + $0xb0] sm:$0xf]
        %v1521 = vld [vmem:[#allocation9 + $0xb4] sm:$0xf]
        %v1522 = vld [vmem:[#allocation9 + $0xb8] sm:$0xf]
        %v1523 = vld [vmem:[#allocation9 + $0xbc] sm:$0xf]
        %v1524 = vld [vmem:[#allocation9 + $0xc0] sm:$0xf]
        %v1525 = vld [vmem:[#allocation9 + $0xc4] sm:$0xf]
        %v1526 = vld [vmem:[#allocation9 + $0xc8] sm:$0xf]
        %v1527 = vld [vmem:[#allocation9 + $0xcc] sm:$0xf]
        %v1528 = vld [vmem:[#allocation9 + $0xd0] sm:$0xf]
        %v1529 = vld [vmem:[#allocation9 + $0xd4] sm:$0xf]
        %v1530 = vld [vmem:[#allocation9 + $0xd8] sm:$0xf]
        %v1531 = vld [vmem:[#allocation9 + $0xdc] sm:$0xf]
        %v1532 = vld [vmem:[#allocation9 + $0xe0] sm:$0xf]
        %v1533 = vld [vmem:[#allocation9 + $0xe4] sm:$0xf]
        %v1534 = vld [vmem:[#allocation9 + $0xe8] sm:$0xf]
        %v1535 = vld [vmem:[#allocation9 + $0xec] sm:$0xf]
        %v1536 = vld [vmem:[#allocation9 + $0xf0] sm:$0xf]
        %v1537 = vld [vmem:[#allocation9 + $0xf4] sm:$0xf]
        %v1538 = vld [vmem:[#allocation9 + $0xf8] sm:$0xf]
        %v1539 = vld [vmem:[#allocation9 + $0xfc] sm:$0xf]
        %v1604 = vunpack.c.l.b16 %v1476
        %v1605 = vunpack.c.l.b16 %v1477
        %v1606 = vunpack.c.l.b16 %v1478
        %v1607 = vunpack.c.l.b16 %v1479
        %v1608 = vunpack.c.l.b16 %v1480
        %v1609 = vunpack.c.l.b16 %v1481
        %v1610 = vunpack.c.l.b16 %v1482
        %v1611 = vunpack.c.l.b16 %v1483
        %v1612 = vunpack.c.l.b16 %v1484
        %v1613 = vunpack.c.l.b16 %v1485
        %v1614 = vunpack.c.l.b16 %v1486
        %v1615 = vunpack.c.l.b16 %v1487
        %v1616 = vunpack.c.l.b16 %v1488
        %v1617 = vunpack.c.l.b16 %v1489
        %v1618 = vunpack.c.l.b16 %v1490
        %v1619 = vunpack.c.l.b16 %v1491
        %v1620 = vunpack.c.l.b16 %v1492
        %v1621 = vunpack.c.l.b16 %v1493
        %v1622 = vunpack.c.l.b16 %v1494
        %v1623 = vunpack.c.l.b16 %v1495
        %v1624 = vunpack.c.l.b16 %v1496
        %v1625 = vunpack.c.l.b16 %v1497
        %v1626 = vunpack.c.l.b16 %v1498
        %v1627 = vunpack.c.l.b16 %v1499
        %v1628 = vunpack.c.l.b16 %v1500
        %v1629 = vunpack.c.l.b16 %v1501
        %v1630 = vunpack.c.l.b16 %v1502
        %v1631 = vunpack.c.l.b16 %v1503
        %v1632 = vunpack.c.l.b16 %v1504
        %v1633 = vunpack.c.l.b16 %v1505
        %v1634 = vunpack.c.l.b16 %v1506
        %v1635 = vunpack.c.l.b16 %v1507
        %v1636 = vunpack.c.l.b16 %v1508
        %v1637 = vunpack.c.l.b16 %v1509
        %v1638 = vunpack.c.l.b16 %v1510
        %v1639 = vunpack.c.l.b16 %v1511
        %v1640 = vunpack.c.l.b16 %v1512
        %v1641 = vunpack.c.l.b16 %v1513
        %v1642 = vunpack.c.l.b16 %v1514
        %v1643 = vunpack.c.l.b16 %v1515
        %v1644 = vunpack.c.l.b16 %v1516
        %v1645 = vunpack.c.l.b16 %v1517
        %v1646 = vunpack.c.l.b16 %v1518
        %v1647 = vunpack.c.l.b16 %v1519
        %v1648 = vunpack.c.l.b16 %v1520
        %v1649 = vunpack.c.l.b16 %v1521
        %v1650 = vunpack.c.l.b16 %v1522
        %v1651 = vunpack.c.l.b16 %v1523
        %v1652 = vunpack.c.l.b16 %v1524
        %v1653 = vunpack.c.l.b16 %v1525
        %v1654 = vunpack.c.l.b16 %v1526
        %v1655 = vunpack.c.l.b16 %v1527
        %v1656 = vunpack.c.l.b16 %v1528
        %v1657 = vunpack.c.l.b16 %v1529
        %v1658 = vunpack.c.l.b16 %v1530
        %v1659 = vunpack.c.l.b16 %v1531
        %v1660 = vunpack.c.l.b16 %v1532
        %v1661 = vunpack.c.l.b16 %v1533
        %v1662 = vunpack.c.l.b16 %v1534
        %v1663 = vunpack.c.l.b16 %v1535
        %v1664 = vunpack.c.l.b16 %v1536
        %v1665 = vunpack.c.l.b16 %v1537
        %v1666 = vunpack.c.l.b16 %v1538
        %v1667 = vunpack.c.l.b16 %v1539
        %v1668 = vpack.c.b16 %v1605, %v1604
        %v1669 = vpack.c.b16 %v1607, %v1606
        %v1670 = vpack.c.b16 %v1609, %v1608
        %v1671 = vpack.c.b16 %v1611, %v1610
        %v1672 = vpack.c.b16 %v1613, %v1612
        %v1673 = vpack.c.b16 %v1615, %v1614
        %v1674 = vpack.c.b16 %v1617, %v1616
        %v1675 = vpack.c.b16 %v1619, %v1618
        %v1676 = vpack.c.b16 %v1621, %v1620
        %v1677 = vpack.c.b16 %v1623, %v1622
        %v1678 = vpack.c.b16 %v1625, %v1624
        %v1679 = vpack.c.b16 %v1627, %v1626
        %v1680 = vpack.c.b16 %v1629, %v1628
        %v1681 = vpack.c.b16 %v1631, %v1630
        %v1682 = vpack.c.b16 %v1633, %v1632
        %v1683 = vpack.c.b16 %v1635, %v1634
        %v1684 = vpack.c.b16 %v1637, %v1636
        %v1685 = vpack.c.b16 %v1639, %v1638
        %v1686 = vpack.c.b16 %v1641, %v1640
        %v1687 = vpack.c.b16 %v1643, %v1642
        %v1688 = vpack.c.b16 %v1645, %v1644
        %v1689 = vpack.c.b16 %v1647, %v1646
        %v1690 = vpack.c.b16 %v1649, %v1648
        %v1691 = vpack.c.b16 %v1651, %v1650
        %v1692 = vpack.c.b16 %v1653, %v1652
        %v1693 = vpack.c.b16 %v1655, %v1654
        %v1694 = vpack.c.b16 %v1657, %v1656
        %v1695 = vpack.c.b16 %v1659, %v1658
        %v1696 = vpack.c.b16 %v1661, %v1660
        %v1697 = vpack.c.b16 %v1663, %v1662
        %v1698 = vpack.c.b16 %v1665, %v1664
        %v1699 = vpack.c.b16 %v1667, %v1666
        %1732 = vmatprep.subr.bf16.mxu0 0
        %1733 = vmatpush1.bf16.msra.mxu0 %v1668
        %1734 = vmatprep.subr.bf16.mxu0 0
        %1735 = vmatpush1.bf16.msra.mxu0 %v1669
        %1736 = vmatprep.subr.bf16.mxu0 0
        %1737 = vmatpush1.bf16.msra.mxu0 %v1670
        %1738 = vmatprep.subr.bf16.mxu0 0
        %1739 = vmatpush1.bf16.msra.mxu0 %v1671
        %1740 = vmatprep.subr.bf16.mxu0 0
        %1741 = vmatpush1.bf16.msra.mxu0 %v1672
        %1742 = vmatprep.subr.bf16.mxu0 0
        %1743 = vmatpush1.bf16.msra.mxu0 %v1673
        %1744 = vmatprep.subr.bf16.mxu0 0
        %1745 = vmatpush1.bf16.msra.mxu0 %v1674
        %1746 = vmatprep.subr.bf16.mxu0 0
        %1747 = vmatpush1.bf16.msra.mxu0 %v1675
        %1748 = vmatprep.subr.bf16.mxu0 0
        %1749 = vmatpush1.bf16.msra.mxu0 %v1676
        %1750 = vmatprep.subr.bf16.mxu0 0
        %1751 = vmatpush1.bf16.msra.mxu0 %v1677
        %1752 = vmatprep.subr.bf16.mxu0 0
        %1753 = vmatpush1.bf16.msra.mxu0 %v1678
        %1754 = vmatprep.subr.bf16.mxu0 0
        %1755 = vmatpush1.bf16.msra.mxu0 %v1679
        %1756 = vmatprep.subr.bf16.mxu0 0
        %1757 = vmatpush1.bf16.msra.mxu0 %v1680
        %1758 = vmatprep.subr.bf16.mxu0 0
        %1759 = vmatpush1.bf16.msra.mxu0 %v1681
        %1760 = vmatprep.subr.bf16.mxu0 0
        %1761 = vmatpush1.bf16.msra.mxu0 %v1682
        %1762 = vmatprep.subr.bf16.mxu0 0
        %1763 = vmatpush1.bf16.msra.mxu0 %v1683
        %1764 = vmatprep.mubr.bf16.mxu0 %v1445
        %1765 = vmatmul.mubr.bf16.gmra.mrb[0].mxu0 %v1444
        %v1766 = vpop.f32.mrb[0].mxu0
        %v1767 = vadd.f32 0.0, %v1766
        %v1768 = vpop.f32.mrb[0].mxu0
        %v1769 = vpop.f32.mrb[0].mxu0
        %v1770 = vadd.f32 0.0, %v1769
        %v1771 = vpop.f32.mrb[0].mxu0
        %1772 = vmatprep.mubr.bf16.mxu0 %v1449
        %1773 = vmatmul.mubr.bf16.gmra.mrb[0].mxu0 %v1448
        %v1774 = vpop.f32.mrb[0].mxu0
        %v1775 = vadd.f32 0.0, %v1774
        %v1776 = vpop.f32.mrb[0].mxu0
        %v1777 = vpop.f32.mrb[0].mxu0
        %v1778 = vadd.f32 0.0, %v1777
        %v1779 = vpop.f32.mrb[0].mxu0
        %1780 = vmatprep.mubr.bf16.mxu0 %v1453
        %1781 = vmatmul.mubr.bf16.gmra.mrb[0].mxu0 %v1452
        %v1782 = vpop.f32.mrb[0].mxu0
        %v1783 = vadd.f32 0.0, %v1782
        %v1784 = vpop.f32.mrb[0].mxu0
        %v1785 = vpop.f32.mrb[0].mxu0
        %v1786 = vadd.f32 0.0, %v1785
        %v1787 = vpop.f32.mrb[0].mxu0
        %1788 = vmatprep.mubr.bf16.mxu0 %v1457
        %1789 = vmatmul.mubr.bf16.gmra.mrb[0].mxu0 %v1456
        %v1790 = vpop.f32.mrb[0].mxu0
        %v1791 = vadd.f32 0.0, %v1790
        %v1792 = vpop.f32.mrb[0].mxu0
        %v1793 = vpop.f32.mrb[0].mxu0
        %v1794 = vadd.f32 0.0, %v1793
        %v1795 = vpop.f32.mrb[0].mxu0
        %1796 = vmatprep.mubr.bf16.mxu0 %v1461
        %1797 = vmatmul.mubr.bf16.gmra.mrb[0].mxu0 %v1460
        %v1798 = vpop.f32.mrb[0].mxu0
        %v1799 = vadd.f32 0.0, %v1798
        %v1800 = vpop.f32.mrb[0].mxu0
        %v1801 = vpop.f32.mrb[0].mxu0
        %v1802 = vadd.f32 0.0, %v1801
        %v1803 = vpop.f32.mrb[0].mxu0
        %1804 = vmatprep.mubr.bf16.mxu0 %v1465
        %1805 = vmatmul.mubr.bf16.gmra.mrb[0].mxu0 %v1464
        %v1806 = vpop.f32.mrb[0].mxu0
        %v1807 = vadd.f32 0.0, %v1806
        %v1808 = vpop.f32.mrb[0].mxu0
        %v1809 = vpop.f32.mrb[0].mxu0
        %v1810 = vadd.f32 0.0, %v1809
        %v1811 = vpop.f32.mrb[0].mxu0
        %1812 = vmatprep.mubr.bf16.mxu0 %v1469
        %1813 = vmatmul.mubr.bf16.gmra.mrb[0].mxu0 %v1468
        %v1814 = vpop.f32.mrb[0].mxu0
        %v1815 = vadd.f32 0.0, %v1814
        %v1816 = vpop.f32.mrb[0].mxu0
        %v1817 = vpop.f32.mrb[0].mxu0
        %v1818 = vadd.f32 0.0, %v1817
        %v1819 = vpop.f32.mrb[0].mxu0
        %1820 = vmatprep.mubr.bf16.mxu0 %v1473
        %1821 = vmatmul.mubr.bf16.gmra.mrb[0].mxu0 %v1472
        %v1822 = vpop.f32.mrb[0].mxu0
        %v1823 = vadd.f32 0.0, %v1822
        %v1824 = vpop.f32.mrb[0].mxu0
        %v1825 = vpop.f32.mrb[0].mxu0
        %v1826 = vadd.f32 0.0, %v1825
        %v1827 = vpop.f32.mrb[0].mxu0
        %1828 = vdwg.mxu0
        %1829 = vmatprep.subr.bf16.mxu0 0
        %1830 = vmatpush1.bf16.msra.mxu0 %v1684
        %1831 = vmatprep.subr.bf16.mxu0 0
        %1832 = vmatpush1.bf16.msra.mxu0 %v1685
        %1833 = vmatprep.subr.bf16.mxu0 0
        %1834 = vmatpush1.bf16.msra.mxu0 %v1686
        %1835 = vmatprep.subr.bf16.mxu0 0
        %1836 = vmatpush1.bf16.msra.mxu0 %v1687
        %1837 = vmatprep.subr.bf16.mxu0 0
        %1838 = vmatpush1.bf16.msra.mxu0 %v1688
        %1839 = vmatprep.subr.bf16.mxu0 0
        %1840 = vmatpush1.bf16.msra.mxu0 %v1689
        %1841 = vmatprep.subr.bf16.mxu0 0
        %1842 = vmatpush1.bf16.msra.mxu0 %v1690
        %1843 = vmatprep.subr.bf16.mxu0 0
        %1844 = vmatpush1.bf16.msra.mxu0 %v1691
        %1845 = vmatprep.subr.bf16.mxu0 0
        %1846 = vmatpush1.bf16.msra.mxu0 %v1692
        %1847 = vmatprep.subr.bf16.mxu0 0
        %1848 = vmatpush1.bf16.msra.mxu0 %v1693
        %1849 = vmatprep.subr.bf16.mxu0 0
        %1850 = vmatpush1.bf16.msra.mxu0 %v1694
        %1851 = vmatprep.subr.bf16.mxu0 0
        %1852 = vmatpush1.bf16.msra.mxu0 %v1695
        %1853 = vmatprep.subr.bf16.mxu0 0
        %1854 = vmatpush1.bf16.msra.mxu0 %v1696
        %1855 = vmatprep.subr.bf16.mxu0 0
        %1856 = vmatpush1.bf16.msra.mxu0 %v1697
        %1857 = vmatprep.subr.bf16.mxu0 0
        %1858 = vmatpush1.bf16.msra.mxu0 %v1698
        %1859 = vmatprep.subr.bf16.mxu0 0
        %1860 = vmatpush1.bf16.msra.mxu0 %v1699
        %1861 = vmatprep.mubr.bf16.mxu0 %v1447
        %1862 = vmatmul.mubr.bf16.gmra.mrb[0].mxu0 %v1446
        %v1863 = vpop.f32.mrb[0].mxu0
        %v1864 = vadd.f32 %v1767, %v1863
        %v1865 = vpop.f32.mrb[0].mxu0
        %v1866 = vpop.f32.mrb[0].mxu0
        %v1867 = vadd.f32 %v1770, %v1866
        %v1868 = vpop.f32.mrb[0].mxu0
        %1869 = vmatprep.mubr.bf16.mxu0 %v1451
        %1870 = vmatmul.mubr.bf16.gmra.mrb[0].mxu0 %v1450
        %v1871 = vpop.f32.mrb[0].mxu0
        %v1872 = vadd.f32 %v1775, %v1871
        %v1873 = vpop.f32.mrb[0].mxu0
        %v1874 = vpop.f32.mrb[0].mxu0
        %v1875 = vadd.f32 %v1778, %v1874
        %v1876 = vpop.f32.mrb[0].mxu0
        %1877 = vmatprep.mubr.bf16.mxu0 %v1455
        %1878 = vmatmul.mubr.bf16.gmra.mrb[0].mxu0 %v1454
        %v1879 = vpop.f32.mrb[0].mxu0
        %v1880 = vadd.f32 %v1783, %v1879
        %v1881 = vpop.f32.mrb[0].mxu0
        %v1882 = vpop.f32.mrb[0].mxu0
        %v1883 = vadd.f32 %v1786, %v1882
        %v1884 = vpop.f32.mrb[0].mxu0
        %1885 = vmatprep.mubr.bf16.mxu0 %v1459
        %1886 = vmatmul.mubr.bf16.gmra.mrb[0].mxu0 %v1458
        %v1887 = vpop.f32.mrb[0].mxu0
        %v1888 = vadd.f32 %v1791, %v1887
        %v1889 = vpop.f32.mrb[0].mxu0
        %v1890 = vpop.f32.mrb[0].mxu0
        %v1891 = vadd.f32 %v1794, %v1890
        %v1892 = vpop.f32.mrb[0].mxu0
        %1893 = vmatprep.mubr.bf16.mxu0 %v1463
        %1894 = vmatmul.mubr.bf16.gmra.mrb[0].mxu0 %v1462
        %v1895 = vpop.f32.mrb[0].mxu0
        %v1896 = vadd.f32 %v1799, %v1895
        %v1897 = vpop.f32.mrb[0].mxu0
        %v1898 = vpop.f32.mrb[0].mxu0
        %v1899 = vadd.f32 %v1802, %v1898
        %v1900 = vpop.f32.mrb[0].mxu0
        %1901 = vmatprep.mubr.bf16.mxu0 %v1467
        %1902 = vmatmul.mubr.bf16.gmra.mrb[0].mxu0 %v1466
        %v1903 = vpop.f32.mrb[0].mxu0
        %v1904 = vadd.f32 %v1807, %v1903
        %v1905 = vpop.f32.mrb[0].mxu0
        %v1906 = vpop.f32.mrb[0].mxu0
        %v1907 = vadd.f32 %v1810, %v1906
        %v1908 = vpop.f32.mrb[0].mxu0
        %1909 = vmatprep.mubr.bf16.mxu0 %v1471
        %1910 = vmatmul.mubr.bf16.gmra.mrb[0].mxu0 %v1470
        %v1911 = vpop.f32.mrb[0].mxu0
        %v1912 = vadd.f32 %v1815, %v1911
        %v1913 = vpop.f32.mrb[0].mxu0
        %v1914 = vpop.f32.mrb[0].mxu0
        %v1915 = vadd.f32 %v1818, %v1914
        %v1916 = vpop.f32.mrb[0].mxu0
        %1917 = vmatprep.mubr.bf16.mxu0 %v1475
        %1918 = vmatmul.mubr.bf16.gmra.mrb[0].mxu0 %v1474
        %v1919 = vpop.f32.mrb[0].mxu0
        %v1920 = vadd.f32 %v1823, %v1919
        %v1921 = vpop.f32.mrb[0].mxu0
        %v1922 = vpop.f32.mrb[0].mxu0
        %v1923 = vadd.f32 %v1826, %v1922
        %v1924 = vpop.f32.mrb[0].mxu0
        %1925 = vdwg.mxu0
        %v1926 = vadd.f32 %v1428, %v1864
        %v1927 = vadd.f32 %v1429, %v1867
        %v1928 = vadd.f32 %v1430, %v1872
        %v1929 = vadd.f32 %v1431, %v1875
        %v1930 = vadd.f32 %v1432, %v1880
        %v1931 = vadd.f32 %v1433, %v1883
        %v1932 = vadd.f32 %v1434, %v1888
        %v1933 = vadd.f32 %v1435, %v1891
        %v1934 = vadd.f32 %v1436, %v1896
        %v1935 = vadd.f32 %v1437, %v1899
        %v1936 = vadd.f32 %v1438, %v1904
        %v1937 = vadd.f32 %v1439, %v1907
        %v1938 = vadd.f32 %v1440, %v1912
        %v1939 = vadd.f32 %v1441, %v1915
        %v1940 = vadd.f32 %v1442, %v1920
        %v1941 = vadd.f32 %v1443, %v1923
        %1942 = vst [vmem:[#allocation3] sm:$0xff] %v1926
        %1943 = vst [vmem:[#allocation3 + $0x8] sm:$0xff] %v1927
        %1944 = vst [vmem:[#allocation3 + $0x10] sm:$0xff] %v1928
        %1945 = vst [vmem:[#allocation3 + $0x18] sm:$0xff] %v1929
        %1946 = vst [vmem:[#allocation3 + $0x20] sm:$0xff] %v1930
        %1947 = vst [vmem:[#allocation3 + $0x28] sm:$0xff] %v1931
        %1948 = vst [vmem:[#allocation3 + $0x30] sm:$0xff] %v1932
        %1949 = vst [vmem:[#allocation3 + $0x38] sm:$0xff] %v1933
        %1950 = vst [vmem:[#allocation3 + $0x40] sm:$0xff] %v1934
        %1951 = vst [vmem:[#allocation3 + $0x48] sm:$0xff] %v1935
        %1952 = vst [vmem:[#allocation3 + $0x50] sm:$0xff] %v1936
        %1953 = vst [vmem:[#allocation3 + $0x58] sm:$0xff] %v1937
        %1954 = vst [vmem:[#allocation3 + $0x60] sm:$0xff] %v1938
        %1955 = vst [vmem:[#allocation3 + $0x68] sm:$0xff] %v1939
        %1956 = vst [vmem:[#allocation3 + $0x70] sm:$0xff] %v1940
        %1957 = vst [vmem:[#allocation3 + $0x78] sm:$0xff] %v1941
        // Predicated region
        $region65: #{tpu_custom_call.1} parent=47 // pred_check
          %p1958 = pneg %p377
        $region66: #{tpu_custom_call.1} parent=47 // pred_check_branch
          %1960 = sbr.rel (%p1958) target = $region68
        $region67: #{tpu_custom_call.1} parent=47 // pred_region
          %v1961 = vld [vmem:[#allocation3] sm:$0xff]
          %v1962 = vld [vmem:[#allocation3 + $0x8] sm:$0xff]
          %v1963 = vld [vmem:[#allocation3 + $0x10] sm:$0xff]
          %v1964 = vld [vmem:[#allocation3 + $0x18] sm:$0xff]
          %v1965 = vld [vmem:[#allocation3 + $0x20] sm:$0xff]
          %v1966 = vld [vmem:[#allocation3 + $0x28] sm:$0xff]
          %v1967 = vld [vmem:[#allocation3 + $0x30] sm:$0xff]
          %v1968 = vld [vmem:[#allocation3 + $0x38] sm:$0xff]
          %v1969 = vld [vmem:[#allocation3 + $0x40] sm:$0xff]
          %v1970 = vld [vmem:[#allocation3 + $0x48] sm:$0xff]
          %v1971 = vld [vmem:[#allocation3 + $0x50] sm:$0xff]
          %v1972 = vld [vmem:[#allocation3 + $0x58] sm:$0xff]
          %v1973 = vld [vmem:[#allocation3 + $0x60] sm:$0xff]
          %v1974 = vld [vmem:[#allocation3 + $0x68] sm:$0xff]
          %v1975 = vld [vmem:[#allocation3 + $0x70] sm:$0xff]
          %v1976 = vld [vmem:[#allocation3 + $0x78] sm:$0xff]
          %1977 = vst [vmem:[%s367] sm:$0xff] %v1961
          %1978 = vst [vmem:[%s367 + $0x8] sm:$0xff] %v1962
          %1979 = vst [vmem:[%s367 + $0x10] sm:$0xff] %v1963
          %1980 = vst [vmem:[%s367 + $0x18] sm:$0xff] %v1964
          %1981 = vst [vmem:[%s367 + $0x20] sm:$0xff] %v1965
          %1982 = vst [vmem:[%s367 + $0x28] sm:$0xff] %v1966
          %1983 = vst [vmem:[%s367 + $0x30] sm:$0xff] %v1967
          %1984 = vst [vmem:[%s367 + $0x38] sm:$0xff] %v1968
          %1985 = vst [vmem:[%s367 + $0x40] sm:$0xff] %v1969
          %1986 = vst [vmem:[%s367 + $0x48] sm:$0xff] %v1970
          %1987 = vst [vmem:[%s367 + $0x50] sm:$0xff] %v1971
          %1988 = vst [vmem:[%s367 + $0x58] sm:$0xff] %v1972
          %1989 = vst [vmem:[%s367 + $0x60] sm:$0xff] %v1973
          %1990 = vst [vmem:[%s367 + $0x68] sm:$0xff] %v1974
          %1991 = vst [vmem:[%s367 + $0x70] sm:$0xff] %v1975
          %1992 = vst [vmem:[%s367 + $0x78] sm:$0xff] %v1976
        $region68: #{tpu_custom_call.1} parent=47 // pred_fallthru
          _
        %s1993 = sand.u32 %s212, 1
        %s1994 = scalar_lea.sflag [#allocation6], %s1993
        %s1995 = sand.u32 %s212, 1
        %s1996 = smul.addr %s1995, 128
        %s1997 = scalar_lea.vmem [#allocation10], %s1996
        // Predicated region
        $region69: #{tpu_custom_call.1} parent=47 // pred_check
          %p1998 = pneg %p222
        $region70: #{tpu_custom_call.1} parent=47 // pred_check_branch
          %2000 = sbr.rel (%p1998) target = $region72
        $region71: #{tpu_custom_call.1} parent=47 // pred_region
          %s2001 = smul.u32 16, %s29
          %s2003 = ssub.s32 2048, 2048
          %2004 = vsyncadd %s1994, %s2003
          %s2005 = smul.addr %s2001, 128
          %s2006 = scalar_lea.hbm %s7, %s2005
          %s2007 = sshll.u32 %s1997, 4
          %s2008 = int_to_ptr.vmem [resolvable:$true] %s2007
          %2013 = dma.vmem_to_hbm [thread:$0]  %s2008, 2048, %s2006, %s1994, 128, 128, 8
        $region72: #{tpu_custom_call.1} parent=47 // pred_fallthru
          _
      $region48: #{tpu_custom_call.1} parent=5 // pred_fallthru
        _
      %p2014 = scmp.le.s32.totalorder 2, %s20
      // Predicated region
      $region73: #{tpu_custom_call.1} parent=5 // pred_check
        %p2015 = pneg %p2014
      $region74: #{tpu_custom_call.1} parent=5 // pred_check_branch
        %2017 = sbr.rel (%p2015) target = $region76
      $region75: #{tpu_custom_call.1} parent=5 // pred_region
        %s2018 = ssub.s32 %s20, 2
        // Predicated region
        $region77: #{tpu_custom_call.1} parent=75 // pred_check
          %p2019 = pneg %p228
        $region78: #{tpu_custom_call.1} parent=75 // pred_check_branch
          %2021 = sbr.rel (%p2019) target = $region80
        $region79: #{tpu_custom_call.1} parent=75 // pred_region
          %s2022 = sand.u32 %s213, 1
          %s2023 = scalar_lea.sflag [#allocation6], %s2022
          %s2024 = sand.u32 %s213, 1
          %s2025 = smul.addr %s2024, 128
          %s2026 = scalar_lea.vmem [#allocation10], %s2025
          %2027 = dma.done %s2023, 2048
        $region80: #{tpu_custom_call.1} parent=75 // pred_fallthru
          _
      $region76: #{tpu_custom_call.1} parent=5 // pred_fallthru
        _
    $region6: #{tpu_custom_call.1} parent=1 // loop_footer
      %s24 = sadd.s32 1, %s20
    $region7: #{tpu_custom_call.1} parent=1 // loop_footer_branch
      %19 = sbr.rel target = $region3
    $region8: #{tpu_custom_call.1} parent=1 // loop_exit
      _
    %2028 = vsyncpa [#allocation5], 1
    %s2029 = scalar_lea.sflag [#allocation5], 1
    %2030 = vsyncpa %s2029, 1
    %2031 = vsyncpa [#allocation8], 1
    %2032 = vsyncpa [#allocation6], 1
    %s2033 = scalar_lea.sflag [#allocation6], 1
    %2034 = vsyncpa %s2033, 1

</llo_original>
